<compile_context>
chip_gen: v7x
topology: tpu7x:2x2x1
jax: 0.10.0
libtpu: 0.0.40
codegen_flags: <defaults>
</compile_context>

<pallas_src>
import functools

import jax
import jax.numpy as jnp
from jax import lax
from jax.experimental import pallas as pl
from jax.experimental.pallas import tpu as pltpu


def _round_up(x, m):
    return (x + m - 1) // m * m


# ----------------------------------------------------------------------------
# Fused Pallas kernel: grid point 0 = CNN head, grid point 1 = y2v MLP
# ----------------------------------------------------------------------------
def _semantic_kernel(xslab_ref, cw_ref, cb_ref, pw_ref, pb_ref,
                     y_ref, w1_ref, b1_ref, w2_ref, b2_ref,
                     o_ref, *, B, H, WC):
    """
    xslab_ref : (B*H, Kc)    bf16  3-row im2col slab (dh folded into K, zero-padded)
    cw_ref    : (Kc, W*Cout) bf16  dh-folded banded (Toeplitz) conv weight
    cb_ref    : (1, W*Cout)  f32   conv bias tiled over W
    pw_ref    : (W*Cout, F)  bf16  proj weight tiled over W, 1/(H*W) folded in
    pb_ref    : (1, F)       f32
    y_ref     : (B, Kp)      bf16  class scores, zero-padded to Kp
    w1_ref    : (Kp, E)      bf16  / b1_ref (1, E) f32
    w2_ref    : (E, F)       bf16  / b2_ref (1, F) f32
    o_ref     : (1, B, F)    f32   block i of the stacked (2, B, F) output
    """
    i = pl.program_id(0)

    @pl.when(i == 0)
    def _cnn_head():
        # conv3x3 as ONE MXU matmul against the dh-folded banded weight
        acc = jnp.dot(xslab_ref[...], cw_ref[...],
                      preferred_element_type=jnp.float32)          # (B*H, W*Cout)
        acc = jnp.maximum(acc + cb_ref[...], 0.0)                  # bias + ReLU, f32
        # global mean pool: H-sum here; W-sum and 1/(H*W) are folded into pw_ref
        pooled = acc.reshape(B, H, WC).sum(axis=1)                 # (B, W*Cout)
        feat = jnp.dot(pooled.astype(pw_ref.dtype), pw_ref[...],
                       preferred_element_type=jnp.float32) + pb_ref[...]
        o_ref[0] = feat.astype(o_ref.dtype)

    @pl.when(i == 1)
    def _y2v_mlp():
        h = jnp.dot(y_ref[...], w1_ref[...], preferred_element_type=jnp.float32)
        h = jnp.maximum(h + b1_ref[...], 0.0)
        o = jnp.dot(h.astype(w2_ref.dtype), w2_ref[...],
                    preferred_element_type=jnp.float32)
        o_ref[0] = jnp.maximum(o + b2_ref[...], 0.0).astype(o_ref.dtype)


# ----------------------------------------------------------------------------
# Wrapper: layout plumbing + single pallas_call
# ----------------------------------------------------------------------------
def semantic_net_forward(kparams, x, y):
    B, Cin, H, W = x.shape
    Wp = W + 2
    Kc, WC = kparams["conv_wt"].shape
    F = kparams["proj_wt"].shape[1]
    Kp, E = kparams["lin1_w"].shape
    F2 = kparams["lin2_w"].shape[1]
    assert F == F2

    # ---- layout plumbing (fuses into the XLA ops feeding the kernel) --------
    x_nhwc = jnp.transpose(x, (0, 2, 3, 1)).astype(jnp.bfloat16)
    xp = jnp.pad(x_nhwc, ((0, 0), (1, 1), (1, 1), (0, 0)))        # (B, Hp, Wp, Cin)
    # 3-row im2col over H only; dh is the major index of the contraction dim
    taps = jnp.stack([xp[:, dh:dh + H] for dh in range(3)], axis=2)  # (B,H,3,Wp,Cin)
    xslab = taps.reshape(B * H, 3 * Wp * Cin)
    xslab = jnp.pad(xslab, ((0, 0), (0, Kc - 3 * Wp * Cin)))      # K -> mult of 128

    y_pad = jnp.pad(y.astype(jnp.bfloat16), ((0, 0), (0, Kp - y.shape[1])))

    # ---- advisory cost estimate ---------------------------------------------
    flops = 2 * (B * H * Kc * WC + B * WC * F + B * Kp * E + B * E * F)
    weight_args = (kparams["conv_wt"], kparams["conv_bt"], kparams["proj_wt"],
                   kparams["proj_b"], kparams["lin1_w"], kparams["lin1_b"],
                   kparams["lin2_w"], kparams["lin2_b"])
    bytes_accessed = (4 * 2 * B * F
                      + xslab.size * xslab.dtype.itemsize
                      + y_pad.size * y_pad.dtype.itemsize
                      + sum(a.size * a.dtype.itemsize for a in weight_args))

    kernel = functools.partial(_semantic_kernel, B=B, H=H, WC=WC)
    out = pl.pallas_call(
        kernel,
        out_shape=jax.ShapeDtypeStruct((2, B, F), jnp.float32),
        grid=(2,),
        in_specs=[
            pl.BlockSpec((B * H, Kc), lambda i: (0, 0)),
            pl.BlockSpec((Kc, WC), lambda i: (0, 0)),
            pl.BlockSpec((1, WC), lambda i: (0, 0)),
            pl.BlockSpec((WC, F), lambda i: (0, 0)),
            pl.BlockSpec((1, F), lambda i: (0, 0)),
            pl.BlockSpec((B, Kp), lambda i: (0, 0)),
            pl.BlockSpec((Kp, E), lambda i: (0, 0)),
            pl.BlockSpec((1, E), lambda i: (0, 0)),
            pl.BlockSpec((E, F), lambda i: (0, 0)),
            pl.BlockSpec((1, F), lambda i: (0, 0)),
        ],
        out_specs=pl.BlockSpec((1, B, F), lambda i: (i, 0, 0)),
        compiler_params=pltpu.CompilerParams(
            dimension_semantics=("parallel",),      # v7x: one sub-net per TC
            vmem_limit_bytes=32 * 1024 * 1024,
        ),
        cost_estimate=pl.CostEstimate(flops=int(flops), transcendentals=0,
                                      bytes_accessed=int(bytes_accessed)),
    )(xslab, kparams["conv_wt"], kparams["conv_bt"],
      kparams["proj_wt"], kparams["proj_b"],
      y_pad, kparams["lin1_w"], kparams["lin1_b"],
      kparams["lin2_w"], kparams["lin2_b"])

    # Mirrors PyTorch's `v_x.squeeze()`; note it would also drop a B=1 batch dim.
    v_x = jnp.squeeze(out[0])
    v_y = out[1]
    return v_x, v_y


# ----------------------------------------------------------------------------
# Parameter init + one-time kernel-layout weight preprocessing
# ----------------------------------------------------------------------------
def init_params(key, *, cin=4, conv_c=8, feat_dim=512,
                num_classes=200, embedding_dim=512):
    ks = jax.random.split(key, 8)

    def u(k, shape, fan_in):
        bound = 1.0 / jnp.sqrt(jnp.float32(fan_in))
        return jax.random.uniform(k, shape, jnp.float32, -bound, bound)

    return {
        # stand-in CNN backbone
        "conv_w": u(ks[0], (3, 3, cin, conv_c), 9 * cin),
        "conv_b": u(ks[1], (conv_c,), 9 * cin),
        "proj_w": u(ks[2], (conv_c, feat_dim), conv_c),
        "proj_b": u(ks[3], (feat_dim,), conv_c),
        # y2v MLP (weights stored as (in, out), i.e. PyTorch W.T)
        "lin1_w": u(ks[4], (num_classes, embedding_dim), num_classes),
        "lin1_b": u(ks[5], (embedding_dim,), num_classes),
        "lin2_w": u(ks[6], (embedding_dim, 512), embedding_dim),
        "lin2_b": u(ks[7], (512,), embedding_dim),
    }


def _conv_row_toeplitz(conv_w, W):
    """(KH,KW,Cin,Cout) -> (KH, (W+KW-1)*Cin, W*Cout) banded matrices such that
    row_slab(dh) @ mat[dh] gives the conv contribution of kernel-row dh for all W
    output positions (lane index = w*Cout + co)."""
    KH, KW, Cin, Cout = conv_w.shape
    rows = (W + KW - 1) * Cin
    eye = jnp.eye(W, dtype=conv_w.dtype)
    mats = []
    for dh in range(KH):
        m = jnp.zeros((rows, W * Cout), conv_w.dtype)
        for dw in range(KW):
            blk = jnp.kron(eye, conv_w[dh, dw])                 # (W*Cin, W*Cout)
            m = m.at[dw * Cin:dw * Cin + W * Cin, :].add(blk)
        mats.append(m)
    return jnp.stack(mats, axis=0)


def prepare_params(params, *, image_hw):
    """One-time repack of PyTorch-style params into kernel-ready (bf16) layouts."""
    H, W = image_hw
    conv_w = params["conv_w"]
    KH, KW, Cin, Cc = conv_w.shape
    Wp = W + KW - 1
    feat = params["proj_w"].shape[-1]

    # dh-folded banded conv weight, contraction dim zero-padded to a 128 multiple
    wt = _conv_row_toeplitz(conv_w, W).reshape(KH * Wp * Cin, W * Cc)
    Kc = _round_up(wt.shape[0], 128)
    wt = jnp.pad(wt, ((0, Kc - wt.shape[0]), (0, 0)))

    # y2v first layer: class dim zero-padded to a 128 multiple (200 -> 256)
    C = params["lin1_w"].shape[0]
    Kp = _round_up(C, 128)
    lin1_w = jnp.pad(params["lin1_w"], ((0, Kp - C), (0, 0)))

    return {
        "conv_wt": wt.astype(jnp.bfloat16),
        "conv_bt": jnp.tile(params["conv_b"], W).reshape(1, W * Cc).astype(jnp.float32),
        # W-tiling folds the pool's W-sum; 1/(H*W) folds the mean scale
        "proj_wt": (jnp.tile(params["proj_w"], (W, 1)) / (H * W)).astype(jnp.bfloat16),
        "proj_b": params["proj_b"].reshape(1, feat).astype(jnp.float32),
        "lin1_w": lin1_w.astype(jnp.bfloat16),
        "lin1_b": params["lin1_b"].reshape(1, -1).astype(jnp.float32),
        "lin2_w": params["lin2_w"].astype(jnp.bfloat16),
        "lin2_b": params["lin2_b"].reshape(1, -1).astype(jnp.float32),
    }


# ----------------------------------------------------------------------------
# Pure-JAX reference (correctness check only)
# ----------------------------------------------------------------------------
def semantic_net_reference(params, x, y):
    x_nhwc = jnp.transpose(x, (0, 2, 3, 1))
    h = lax.conv_general_dilated(x_nhwc, params["conv_w"], (1, 1), "SAME",
                                 dimension_numbers=("NHWC", "HWIO", "NHWC"))
    h = jax.nn.relu(h + params["conv_b"])
    pooled = h.mean(axis=(1, 2))
    v_x = jnp.squeeze(pooled @ params["proj_w"] + params["proj_b"])
    h1 = jax.nn.relu(y @ params["lin1_w"] + params["lin1_b"])
    v_y = jax.nn.relu(h1 @ params["lin2_w"] + params["lin2_b"])
    return v_x, v_y


# ----------------------------------------------------------------------------
if __name__ == "__main__":
    key = jax.random.PRNGKey(0)
    k_params, k_x, k_y = jax.random.split(key, 3)

    B, Cin, H, W = 2, 4, 16, 16
    num_classes, embedding_dim = 200, 512

    params = init_params(k_params, cin=Cin,
                         num_classes=num_classes, embedding_dim=embedding_dim)
    kparams = prepare_params(params, image_hw=(H, W))   # one-time weight repack

    x = jax.random.normal(k_x, (B, Cin, H, W), jnp.float32)   # NCHW, like PyTorch
    y = jax.random.normal(k_y, (B, num_classes), jnp.float32)

    fwd = jax.jit(semantic_net_forward)
    v_x, v_y = fwd(kparams, x, y)
    jax.block_until_ready((v_x, v_y))

    assert v_x.shape == (B, 512), v_x.shape
    assert v_y.shape == (B, 512), v_y.shape
    assert bool(jnp.all(v_y >= 0.0))  # final ReLU in y2v

    # Structural correctness vs. a pure-JAX/XLA f32 reference (loose bf16 tolerance).
    r_x, r_y = semantic_net_reference(params, x, y)
    for name, got, ref in (("v_x", v_x, r_x), ("v_y", v_y, r_y)):
        err = float(jnp.max(jnp.abs(got - ref)))
        thr = 3e-2 * float(jnp.max(jnp.abs(ref))) + 3e-3
        assert err <= thr, f"{name} mismatch: max err {err} > {thr}"

    print("KERNEL_OK")
</pallas_src>

<mosaic_0001>
module attributes {stable_mosaic.version = 11 : i64} {
  func.func @_semantic_kernel(%arg0: i32, %arg1: memref<32x256xbf16, #tpu.memory_space<vmem>>, %arg2: memref<256x128xbf16, #tpu.memory_space<vmem>>, %arg3: memref<1x128xf32, #tpu.memory_space<vmem>>, %arg4: memref<128x512xbf16, #tpu.memory_space<vmem>>, %arg5: memref<1x512xf32, #tpu.memory_space<vmem>>, %arg6: memref<2x256xbf16, #tpu.memory_space<vmem>>, %arg7: memref<256x512xbf16, #tpu.memory_space<vmem>>, %arg8: memref<1x512xf32, #tpu.memory_space<vmem>>, %arg9: memref<512x512xbf16, #tpu.memory_space<vmem>>, %arg10: memref<1x512xf32, #tpu.memory_space<vmem>>, %arg11: memref<1x2x512xf32, #tpu.memory_space<vmem>>) attributes {dimension_semantics = [#tpu.dimension_semantics<parallel>], iteration_bounds = array<i64: 2>, scalar_prefetch = 0 : i64, scratch_operands = 0 : i64, tpu.core_type = #tpu.core_type<tc>, window_params = [{pipeline_mode = #tpu.pipeline_mode<synchronous>, transform_indices = @transform_0, window_bounds = array<i64: 32, 256>}, {pipeline_mode = #tpu.pipeline_mode<synchronous>, transform_indices = @transform_1, window_bounds = array<i64: 256, 128>}, {pipeline_mode = #tpu.pipeline_mode<synchronous>, transform_indices = @transform_2, window_bounds = array<i64: 1, 128>}, {pipeline_mode = #tpu.pipeline_mode<synchronous>, transform_indices = @transform_3, window_bounds = array<i64: 128, 512>}, {pipeline_mode = #tpu.pipeline_mode<synchronous>, transform_indices = @transform_4, window_bounds = array<i64: 1, 512>}, {pipeline_mode = #tpu.pipeline_mode<synchronous>, transform_indices = @transform_5, window_bounds = array<i64: 2, 256>}, {pipeline_mode = #tpu.pipeline_mode<synchronous>, transform_indices = @transform_6, window_bounds = array<i64: 256, 512>}, {pipeline_mode = #tpu.pipeline_mode<synchronous>, transform_indices = @transform_7, window_bounds = array<i64: 1, 512>}, {pipeline_mode = #tpu.pipeline_mode<synchronous>, transform_indices = @transform_8, window_bounds = array<i64: 512, 512>}, {pipeline_mode = #tpu.pipeline_mode<synchronous>, transform_indices = @transform_9, window_bounds = array<i64: 1, 512>}, {transform_indices = @transform_10, window_bounds = array<i64: 1, 2, 512>}]} {
    %c0_i32 = arith.constant 0 : i32
    %0 = arith.cmpi eq, %arg0, %c0_i32 : i32
    %1 = arith.extui %0 : i1 to i32
    %c0_i32_0 = arith.constant 0 : i32
    %2 = arith.cmpi ne, %1, %c0_i32_0 : i32
    scf.if %2 {
      %c0 = arith.constant 0 : index
      %c0_2 = arith.constant 0 : index
      %6 = vector.load %arg1[%c0, %c0_2] : memref<32x256xbf16, #tpu.memory_space<vmem>>, vector<32x256xbf16>
      %c0_3 = arith.constant 0 : index
      %c0_4 = arith.constant 0 : index
      %7 = vector.load %arg2[%c0_3, %c0_4] : memref<256x128xbf16, #tpu.memory_space<vmem>>, vector<256x128xbf16>
      %cst = arith.constant dense<0.000000e+00> : vector<32x128xf32>
      %8 = tpu.matmul %6, %7, %cst {dimension_numbers = #tpu.dot_dimension_numbers<[1], [0], [0], [1], [0, 0, 1, 1], [], []>} : vector<32x256xbf16>, vector<256x128xbf16>, vector<32x128xf32> -> vector<32x128xf32>
      %c0_5 = arith.constant 0 : index
      %c0_6 = arith.constant 0 : index
      %9 = vector.load %arg3[%c0_5, %c0_6] : memref<1x128xf32, #tpu.memory_space<vmem>>, vector<1x128xf32>
      %10 = vector.broadcast %9 : vector<1x128xf32> to vector<32x128xf32>
      %11 = arith.addf %8, %10 : vector<32x128xf32>
      %cst_7 = arith.constant 0.000000e+00 : f32
      %12 = vector.broadcast %cst_7 : f32 to vector<32x128xf32>
      %13 = arith.maximumf %11, %12 : vector<32x128xf32>
      %14 = vector.shape_cast %13 : vector<32x128xf32> to vector<2x16x128xf32>
      %cst_8 = arith.constant dense<0.000000e+00> : vector<2x128xf32>
      %15 = vector.multi_reduction <add>, %14, %cst_8 [1] : vector<2x16x128xf32> to vector<2x128xf32>
      %16 = arith.truncf %15 : vector<2x128xf32> to vector<2x128xbf16>
      %c0_9 = arith.constant 0 : index
      %c0_10 = arith.constant 0 : index
      %17 = vector.load %arg4[%c0_9, %c0_10] : memref<128x512xbf16, #tpu.memory_space<vmem>>, vector<128x512xbf16>
      %cst_11 = arith.constant dense<0.000000e+00> : vector<2x512xf32>
      %18 = tpu.matmul %16, %17, %cst_11 {dimension_numbers = #tpu.dot_dimension_numbers<[1], [0], [0], [1], [0, 0, 1, 1], [], []>} : vector<2x128xbf16>, vector<128x512xbf16>, vector<2x512xf32> -> vector<2x512xf32>
      %c0_12 = arith.constant 0 : index
      %c0_13 = arith.constant 0 : index
      %19 = vector.load %arg5[%c0_12, %c0_13] : memref<1x512xf32, #tpu.memory_space<vmem>>, vector<1x512xf32>
      %20 = vector.broadcast %19 : vector<1x512xf32> to vector<2x512xf32>
      %21 = arith.addf %18, %20 : vector<2x512xf32>
      %c0_14 = arith.constant 0 : index
      %c0_15 = arith.constant 0 : index
      %c0_16 = arith.constant 0 : index
      %22 = vector.load %arg11[%c0_14, %c0_15, %c0_16] : memref<1x2x512xf32, #tpu.memory_space<vmem>>, vector<1x2x512xf32>
      %23 = vector.shape_cast %22 : vector<1x2x512xf32> to vector<2x512xf32>
      %24 = vector.shape_cast %21 : vector<2x512xf32> to vector<1x2x512xf32>
      tpu.vector_store %arg11[%c0_14, %c0_15, %c0_16], %24 {strides = array<i32>} : memref<1x2x512xf32, #tpu.memory_space<vmem>>, vector<1x2x512xf32>,
    } else {
    }
    %c1_i32 = arith.constant 1 : i32
    %3 = arith.cmpi eq, %arg0, %c1_i32 : i32
    %4 = arith.extui %3 : i1 to i32
    %c0_i32_1 = arith.constant 0 : i32
    %5 = arith.cmpi ne, %4, %c0_i32_1 : i32
    scf.if %5 {
      %c0 = arith.constant 0 : index
      %c0_2 = arith.constant 0 : index
      %6 = vector.load %arg6[%c0, %c0_2] : memref<2x256xbf16, #tpu.memory_space<vmem>>, vector<2x256xbf16>
      %c0_3 = arith.constant 0 : index
      %c0_4 = arith.constant 0 : index
      %7 = vector.load %arg7[%c0_3, %c0_4] : memref<256x512xbf16, #tpu.memory_space<vmem>>, vector<256x512xbf16>
      %cst = arith.constant dense<0.000000e+00> : vector<2x512xf32>
      %8 = tpu.matmul %6, %7, %cst {dimension_numbers = #tpu.dot_dimension_numbers<[1], [0], [0], [1], [0, 0, 1, 1], [], []>} : vector<2x256xbf16>, vector<256x512xbf16>, vector<2x512xf32> -> vector<2x512xf32>
      %c0_5 = arith.constant 0 : index
      %c0_6 = arith.constant 0 : index
      %9 = vector.load %arg8[%c0_5, %c0_6] : memref<1x512xf32, #tpu.memory_space<vmem>>, vector<1x512xf32>
      %10 = vector.broadcast %9 : vector<1x512xf32> to vector<2x512xf32>
      %11 = arith.addf %8, %10 : vector<2x512xf32>
      %cst_7 = arith.constant 0.000000e+00 : f32
      %12 = vector.broadcast %cst_7 : f32 to vector<2x512xf32>
      %13 = arith.maximumf %11, %12 : vector<2x512xf32>
      %14 = arith.truncf %13 : vector<2x512xf32> to vector<2x512xbf16>
      %c0_8 = arith.constant 0 : index
      %c0_9 = arith.constant 0 : index
      %15 = vector.load %arg9[%c0_8, %c0_9] : memref<512x512xbf16, #tpu.memory_space<vmem>>, vector<512x512xbf16>
      %cst_10 = arith.constant dense<0.000000e+00> : vector<2x512xf32>
      %16 = tpu.matmul %14, %15, %cst_10 {dimension_numbers = #tpu.dot_dimension_numbers<[1], [0], [0], [1], [0, 0, 1, 1], [], []>} : vector<2x512xbf16>, vector<512x512xbf16>, vector<2x512xf32> -> vector<2x512xf32>
      %c0_11 = arith.constant 0 : index
      %c0_12 = arith.constant 0 : index
      %17 = vector.load %arg10[%c0_11, %c0_12] : memref<1x512xf32, #tpu.memory_space<vmem>>, vector<1x512xf32>
      %18 = vector.broadcast %17 : vector<1x512xf32> to vector<2x512xf32>
      %19 = arith.addf %16, %18 : vector<2x512xf32>
      %cst_13 = arith.constant 0.000000e+00 : f32
      %20 = vector.broadcast %cst_13 : f32 to vector<2x512xf32>
      %21 = arith.maximumf %19, %20 : vector<2x512xf32>
      %c0_14 = arith.constant 0 : index
      %c0_15 = arith.constant 0 : index
      %c0_16 = arith.constant 0 : index
      %22 = vector.load %arg11[%c0_14, %c0_15, %c0_16] : memref<1x2x512xf32, #tpu.memory_space<vmem>>, vector<1x2x512xf32>
      %23 = vector.shape_cast %22 : vector<1x2x512xf32> to vector<2x512xf32>
      %24 = vector.shape_cast %21 : vector<2x512xf32> to vector<1x2x512xf32>
      tpu.vector_store %arg11[%c0_14, %c0_15, %c0_16], %24 {strides = array<i32>} : memref<1x2x512xf32, #tpu.memory_space<vmem>>, vector<1x2x512xf32>,
    } else {
    }
    return
  }
  func.func @transform_0(%arg0: i32) -> (i32, i32) {
    %c0_i32 = arith.constant 0 : i32
    %c0_i32_0 = arith.constant 0 : i32
    %c0_i32_1 = arith.constant 0 : i32
    return %c0_i32, %c0_i32_0 : i32, i32
  }
  func.func @transform_1(%arg0: i32) -> (i32, i32) {
    %c0_i32 = arith.constant 0 : i32
    %c0_i32_0 = arith.constant 0 : i32
    %c0_i32_1 = arith.constant 0 : i32
    return %c0_i32, %c0_i32_0 : i32, i32
  }
  func.func @transform_2(%arg0: i32) -> (i32, i32) {
    %c0_i32 = arith.constant 0 : i32
    %c0_i32_0 = arith.constant 0 : i32
    %c0_i32_1 = arith.constant 0 : i32
    return %c0_i32, %c0_i32_0 : i32, i32
  }
  func.func @transform_3(%arg0: i32) -> (i32, i32) {
    %c0_i32 = arith.constant 0 : i32
    %c0_i32_0 = arith.constant 0 : i32
    %c0_i32_1 = arith.constant 0 : i32
    return %c0_i32, %c0_i32_0 : i32, i32
  }
  func.func @transform_4(%arg0: i32) -> (i32, i32) {
    %c0_i32 = arith.constant 0 : i32
    %c0_i32_0 = arith.constant 0 : i32
    %c0_i32_1 = arith.constant 0 : i32
    return %c0_i32, %c0_i32_0 : i32, i32
  }
  func.func @transform_5(%arg0: i32) -> (i32, i32) {
    %c0_i32 = arith.constant 0 : i32
    %c0_i32_0 = arith.constant 0 : i32
    %c0_i32_1 = arith.constant 0 : i32
    return %c0_i32, %c0_i32_0 : i32, i32
  }
  func.func @transform_6(%arg0: i32) -> (i32, i32) {
    %c0_i32 = arith.constant 0 : i32
    %c0_i32_0 = arith.constant 0 : i32
    %c0_i32_1 = arith.constant 0 : i32
    return %c0_i32, %c0_i32_0 : i32, i32
  }
  func.func @transform_7(%arg0: i32) -> (i32, i32) {
    %c0_i32 = arith.constant 0 : i32
    %c0_i32_0 = arith.constant 0 : i32
    %c0_i32_1 = arith.constant 0 : i32
    return %c0_i32, %c0_i32_0 : i32, i32
  }
  func.func @transform_8(%arg0: i32) -> (i32, i32) {
    %c0_i32 = arith.constant 0 : i32
    %c0_i32_0 = arith.constant 0 : i32
    %c0_i32_1 = arith.constant 0 : i32
    return %c0_i32, %c0_i32_0 : i32, i32
  }
  func.func @transform_9(%arg0: i32) -> (i32, i32) {
    %c0_i32 = arith.constant 0 : i32
    %c0_i32_0 = arith.constant 0 : i32
    %c0_i32_1 = arith.constant 0 : i32
    return %c0_i32, %c0_i32_0 : i32, i32
  }
  func.func @transform_10(%arg0: i32) -> (i32, i32, i32) {
    %c0_i32 = arith.constant 0 : i32
    %c0_i32_0 = arith.constant 0 : i32
    %c0_i32_1 = arith.constant 0 : i32
    return %arg0, %c0_i32, %c0_i32_0 : i32, i32, i32
  }
}

</mosaic_0001>

<llo_original>
// kernel: semantic_net_forward.1
$region0: #{semantic_net_forward.1}
  #allocation0 [shape = 'u32[]', space=smem, size = 0x4, offset = 0x4, fixed_abs, tag = 'smem constant byte address 0x4 - core index']
  #allocation1 [shape = 'u32[144,128]{1,0:T(1,128)}', space=vmem, size = 0x12000, scoped, tag = 'internal scratch']
  %s0 = inlined_call_operand.vmem [shape: bf16[32,256], index: 0, kind: input, shape index: {}]
  %s1 = inlined_call_operand.hbm [shape: bf16[256,128], index: 1, kind: input, shape index: {}]
  %s2 = inlined_call_operand.vmem [shape: f32[1,128], index: 2, kind: input, shape index: {}]
  %s3 = inlined_call_operand.vmem [shape: bf16[128,512], index: 3, kind: input, shape index: {}]
  %s4 = inlined_call_operand.vmem [shape: f32[1,512], index: 4, kind: input, shape index: {}]
  %s5 = inlined_call_operand.vmem [shape: bf16[2,256], index: 5, kind: input, shape index: {}]
  %s6 = inlined_call_operand.vmem [shape: bf16[256,512], index: 6, kind: input, shape index: {}]
  %s7 = inlined_call_operand.vmem [shape: f32[1,512], index: 7, kind: input, shape index: {}]
  %s8 = inlined_call_operand.vmem [shape: bf16[512,512], index: 8, kind: input, shape index: {}]
  %s9 = inlined_call_operand.hbm [shape: f32[1,512], index: 9, kind: input, shape index: {}]
  %s10 = inlined_call_operand.vmem [shape: f32[2,2,512], index: 10, kind: output, shape index: {}]
  %s11 = sld [smem:[#allocation0]]
  $region89: #{semantic_net_forward.1} parent=0
    _
  %s13 = ssub.s32 1, %s11
  %s14 = scalar_select 0, %s13, %s11
  $region1: #{semantic_net_forward.1} parent=0
    #allocation2 [shape = 'u8[65536]{0}', space=vmem, size = 0x10000, scoped, tag = 'input window, operand 1, single buffered']
    #allocation3 [shape = 's32[2]{0}', space=sflag, size = 0x8, scoped, tag = 'scoped memory for semantic_net_forward.1']
    #allocation4 [shape = 'u8[2048]{0}', space=vmem, size = 0x800, scoped, tag = 'input window, operand 9, single buffered']
    #allocation5 [shape = 's32[1]{0}', space=sflag, size = 0x4, scoped, tag = 'scoped memory for semantic_net_forward.1']
    %15 = vsyncpa [#allocation3], 0
    %16 = vsyncpa [#allocation5], 0
    loop: start=0, step=1, limit=4
    $region2: #{semantic_net_forward.1} parent=1 // loop_pre_header
      _
    $region3: #{semantic_net_forward.1} parent=1 // loop_header
      %s18 = sphi 0, %s22
      %p19 = scmp.ge.s32.totalorder %s18, 4
      %s26 = sphi 0, %s26
      %s28 = sphi 0, %s26
      %s29 = sphi 0, %s28
      %s43 = sphi 0, %s29
      %s47 = sphi 0, %s47
      %s49 = sphi 0, %s47
      %s50 = sphi 0, %s49
      %s64 = sphi 0, %s50
      %s68 = sphi 0, %s68
      %s70 = sphi 0, %s68
      %s71 = sphi 0, %s70
      %s85 = sphi 0, %s71
      %s89 = sphi 0, %s89
      %s91 = sphi 0, %s89
      %s92 = sphi 0, %s91
      %s106 = sphi 0, %s92
      %s110 = sphi 0, %s110
      %s112 = sphi 0, %s110
      %s113 = sphi 0, %s112
      %s127 = sphi 0, %s113
      %s131 = sphi 0, %s131
      %s133 = sphi 0, %s131
      %s134 = sphi 0, %s133
      %s148 = sphi 0, %s134
      %s152 = sphi 0, %s152
      %s154 = sphi 0, %s152
      %s155 = sphi 0, %s154
      %s169 = sphi 0, %s155
      %s173 = sphi 0, %s173
      %s175 = sphi 0, %s173
      %s176 = sphi 0, %s175
      %s190 = sphi 0, %s176
      %s194 = sphi 0, %s194
      %s196 = sphi 0, %s194
      %s197 = sphi 0, %s196
      %s211 = sphi 0, %s197
      %s215 = sphi 0, %s215
      %s217 = sphi 0, %s215
      %s218 = sphi 0, %s217
      %s232 = sphi 0, %s218
      %s238 = sphi 0, %s240
      %s241 = sphi 0, %s238
      %s242 = sphi 0, %s241
      %s258 = sphi 0, %s242
    $region4: #{semantic_net_forward.1} parent=1 // loop_header_branch
      %21 = sbr.rel (%p19) target = $region8
    $region5: #{semantic_net_forward.1} parent=1 // loop_body
      %s23 = ssub.s32 %s18, 1
      %s24 = ssub.s32 %s18, 2
      %s25 = sadd.s32 %s18, 1
      %s27 = sadd.s32 %s26, 1
      %p30 = scmp.eq.s32.totalorder %s18, 1
      %p31 = scmp.ne.s32.totalorder %s26, %s28
      %p32 = scmp.eq.s32.totalorder %s18, 0
      %p33 = por %p31, %p32
      %p34 = scmp.ne.s32.totalorder %s26, %s28
      %p35 = scmp.eq.s32.totalorder %s23, 1
      %p36 = por %p34, %p35
      %p37 = scmp.ne.s32.totalorder %s28, %s29
      %p38 = scmp.eq.s32.totalorder %s23, 0
      %p39 = por %p37, %p38
      %p40 = scmp.ne.s32.totalorder %s28, %s29
      %p41 = scmp.eq.s32.totalorder %s24, 1
      %p42 = por %p40, %p41
      %p44 = scmp.ne.s32.totalorder %s29, %s43
      %p45 = scmp.eq.s32.totalorder %s24, 0
      %p46 = por %p44, %p45
      %s48 = sadd.s32 %s47, 1
      %p51 = scmp.eq.s32.totalorder %s18, 1
      %p52 = scmp.ne.s32.totalorder %s47, %s49
      %p53 = scmp.eq.s32.totalorder %s18, 0
      %p54 = por %p52, %p53
      %p55 = scmp.ne.s32.totalorder %s47, %s49
      %p56 = scmp.eq.s32.totalorder %s23, 1
      %p57 = por %p55, %p56
      %p58 = scmp.ne.s32.totalorder %s49, %s50
      %p59 = scmp.eq.s32.totalorder %s23, 0
      %p60 = por %p58, %p59
      %p61 = scmp.ne.s32.totalorder %s49, %s50
      %p62 = scmp.eq.s32.totalorder %s24, 1
      %p63 = por %p61, %p62
      %p65 = scmp.ne.s32.totalorder %s50, %s64
      %p66 = scmp.eq.s32.totalorder %s24, 0
      %p67 = por %p65, %p66
      %s69 = sadd.s32 %s68, 1
      %p72 = scmp.eq.s32.totalorder %s18, 1
      %p73 = scmp.ne.s32.totalorder %s68, %s70
      %p74 = scmp.eq.s32.totalorder %s18, 0
      %p75 = por %p73, %p74
      %p76 = scmp.ne.s32.totalorder %s68, %s70
      %p77 = scmp.eq.s32.totalorder %s23, 1
      %p78 = por %p76, %p77
      %p79 = scmp.ne.s32.totalorder %s70, %s71
      %p80 = scmp.eq.s32.totalorder %s23, 0
      %p81 = por %p79, %p80
      %p82 = scmp.ne.s32.totalorder %s70, %s71
      %p83 = scmp.eq.s32.totalorder %s24, 1
      %p84 = por %p82, %p83
      %p86 = scmp.ne.s32.totalorder %s71, %s85
      %p87 = scmp.eq.s32.totalorder %s24, 0
      %p88 = por %p86, %p87
      %s90 = sadd.s32 %s89, 1
      %p93 = scmp.eq.s32.totalorder %s18, 1
      %p94 = scmp.ne.s32.totalorder %s89, %s91
      %p95 = scmp.eq.s32.totalorder %s18, 0
      %p96 = por %p94, %p95
      %p97 = scmp.ne.s32.totalorder %s89, %s91
      %p98 = scmp.eq.s32.totalorder %s23, 1
      %p99 = por %p97, %p98
      %p100 = scmp.ne.s32.totalorder %s91, %s92
      %p101 = scmp.eq.s32.totalorder %s23, 0
      %p102 = por %p100, %p101
      %p103 = scmp.ne.s32.totalorder %s91, %s92
      %p104 = scmp.eq.s32.totalorder %s24, 1
      %p105 = por %p103, %p104
      %p107 = scmp.ne.s32.totalorder %s92, %s106
      %p108 = scmp.eq.s32.totalorder %s24, 0
      %p109 = por %p107, %p108
      %s111 = sadd.s32 %s110, 1
      %p114 = scmp.eq.s32.totalorder %s18, 1
      %p115 = scmp.ne.s32.totalorder %s110, %s112
      %p116 = scmp.eq.s32.totalorder %s18, 0
      %p117 = por %p115, %p116
      %p118 = scmp.ne.s32.totalorder %s110, %s112
      %p119 = scmp.eq.s32.totalorder %s23, 1
      %p120 = por %p118, %p119
      %p121 = scmp.ne.s32.totalorder %s112, %s113
      %p122 = scmp.eq.s32.totalorder %s23, 0
      %p123 = por %p121, %p122
      %p124 = scmp.ne.s32.totalorder %s112, %s113
      %p125 = scmp.eq.s32.totalorder %s24, 1
      %p126 = por %p124, %p125
      %p128 = scmp.ne.s32.totalorder %s113, %s127
      %p129 = scmp.eq.s32.totalorder %s24, 0
      %p130 = por %p128, %p129
      %s132 = sadd.s32 %s131, 1
      %p135 = scmp.eq.s32.totalorder %s18, 1
      %p136 = scmp.ne.s32.totalorder %s131, %s133
      %p137 = scmp.eq.s32.totalorder %s18, 0
      %p138 = por %p136, %p137
      %p139 = scmp.ne.s32.totalorder %s131, %s133
      %p140 = scmp.eq.s32.totalorder %s23, 1
      %p141 = por %p139, %p140
      %p142 = scmp.ne.s32.totalorder %s133, %s134
      %p143 = scmp.eq.s32.totalorder %s23, 0
      %p144 = por %p142, %p143
      %p145 = scmp.ne.s32.totalorder %s133, %s134
      %p146 = scmp.eq.s32.totalorder %s24, 1
      %p147 = por %p145, %p146
      %p149 = scmp.ne.s32.totalorder %s134, %s148
      %p150 = scmp.eq.s32.totalorder %s24, 0
      %p151 = por %p149, %p150
      %s153 = sadd.s32 %s152, 1
      %p156 = scmp.eq.s32.totalorder %s18, 1
      %p157 = scmp.ne.s32.totalorder %s152, %s154
      %p158 = scmp.eq.s32.totalorder %s18, 0
      %p159 = por %p157, %p158
      %p160 = scmp.ne.s32.totalorder %s152, %s154
      %p161 = scmp.eq.s32.totalorder %s23, 1
      %p162 = por %p160, %p161
      %p163 = scmp.ne.s32.totalorder %s154, %s155
      %p164 = scmp.eq.s32.totalorder %s23, 0
      %p165 = por %p163, %p164
      %p166 = scmp.ne.s32.totalorder %s154, %s155
      %p167 = scmp.eq.s32.totalorder %s24, 1
      %p168 = por %p166, %p167
      %p170 = scmp.ne.s32.totalorder %s155, %s169
      %p171 = scmp.eq.s32.totalorder %s24, 0
      %p172 = por %p170, %p171
      %s174 = sadd.s32 %s173, 1
      %p177 = scmp.eq.s32.totalorder %s18, 1
      %p178 = scmp.ne.s32.totalorder %s173, %s175
      %p179 = scmp.eq.s32.totalorder %s18, 0
      %p180 = por %p178, %p179
      %p181 = scmp.ne.s32.totalorder %s173, %s175
      %p182 = scmp.eq.s32.totalorder %s23, 1
      %p183 = por %p181, %p182
      %p184 = scmp.ne.s32.totalorder %s175, %s176
      %p185 = scmp.eq.s32.totalorder %s23, 0
      %p186 = por %p184, %p185
      %p187 = scmp.ne.s32.totalorder %s175, %s176
      %p188 = scmp.eq.s32.totalorder %s24, 1
      %p189 = por %p187, %p188
      %p191 = scmp.ne.s32.totalorder %s176, %s190
      %p192 = scmp.eq.s32.totalorder %s24, 0
      %p193 = por %p191, %p192
      %s195 = sadd.s32 %s194, 1
      %p198 = scmp.eq.s32.totalorder %s18, 1
      %p199 = scmp.ne.s32.totalorder %s194, %s196
      %p200 = scmp.eq.s32.totalorder %s18, 0
      %p201 = por %p199, %p200
      %p202 = scmp.ne.s32.totalorder %s194, %s196
      %p203 = scmp.eq.s32.totalorder %s23, 1
      %p204 = por %p202, %p203
      %p205 = scmp.ne.s32.totalorder %s196, %s197
      %p206 = scmp.eq.s32.totalorder %s23, 0
      %p207 = por %p205, %p206
      %p208 = scmp.ne.s32.totalorder %s196, %s197
      %p209 = scmp.eq.s32.totalorder %s24, 1
      %p210 = por %p208, %p209
      %p212 = scmp.ne.s32.totalorder %s197, %s211
      %p213 = scmp.eq.s32.totalorder %s24, 0
      %p214 = por %p212, %p213
      %s216 = sadd.s32 %s215, 1
      %p219 = scmp.eq.s32.totalorder %s18, 1
      %p220 = scmp.ne.s32.totalorder %s215, %s217
      %p221 = scmp.eq.s32.totalorder %s18, 0
      %p222 = por %p220, %p221
      %p223 = scmp.ne.s32.totalorder %s215, %s217
      %p224 = scmp.eq.s32.totalorder %s23, 1
      %p225 = por %p223, %p224
      %p226 = scmp.ne.s32.totalorder %s217, %s218
      %p227 = scmp.eq.s32.totalorder %s23, 0
      %p228 = por %p226, %p227
      %p229 = scmp.ne.s32.totalorder %s217, %s218
      %p230 = scmp.eq.s32.totalorder %s24, 1
      %p231 = por %p229, %p230
      %p233 = scmp.ne.s32.totalorder %s218, %s232
      %p234 = scmp.eq.s32.totalorder %s24, 0
      %p235 = por %p233, %p234
      %s236 = ssub.s32 %s18, %s25
      %p237 = scmp.eq.s32.totalorder %s236, 0
      %s239 = sadd.s32 %s238, 1
      %s240 = scalar_select %p237, %s238, %s239
      %p243 = pneg %p237
      %p244 = scmp.eq.s32.totalorder %s18, 1
      %p245 = por %p243, %p244
      %p246 = scmp.ne.s32.totalorder %s238, %s241
      %p247 = scmp.eq.s32.totalorder %s18, 0
      %p248 = por %p246, %p247
      %p249 = scmp.ne.s32.totalorder %s238, %s241
      %p250 = scmp.eq.s32.totalorder %s23, 1
      %p251 = por %p249, %p250
      %p252 = scmp.ne.s32.totalorder %s241, %s242
      %p253 = scmp.eq.s32.totalorder %s23, 0
      %p254 = por %p252, %p253
      %p255 = scmp.ne.s32.totalorder %s241, %s242
      %p256 = scmp.eq.s32.totalorder %s24, 1
      %p257 = por %p255, %p256
      %p259 = scmp.ne.s32.totalorder %s242, %s258
      %p260 = scmp.eq.s32.totalorder %s24, 0
      %p261 = por %p259, %p260
      %p262 = scmp.le.s32.totalorder 1, %s18
      %p263 = scmp.lt.s32.totalorder %s18, 3
      %p264 = pnand %p262, %p263
      %p265 = pneg %p264
      // Predicated region
      $region9: #{semantic_net_forward.1} parent=5 // pred_check
        _
      $region10: #{semantic_net_forward.1} parent=5 // pred_check_branch
        %267 = sbr.rel (%p264) target = $region12
      $region11: #{semantic_net_forward.1} parent=5 // pred_region
        %s268 = ssub.s32 %s18, 1
        // Predicated region
        $region13: #{semantic_net_forward.1} parent=11 // pred_check
          %p269 = pneg %p39
        $region14: #{semantic_net_forward.1} parent=11 // pred_check_branch
          %271 = sbr.rel (%p269) target = $region16
        $region15: #{semantic_net_forward.1} parent=11 // pred_region
          _
        $region16: #{semantic_net_forward.1} parent=11 // pred_fallthru
          _
        // Predicated region
        $region17: #{semantic_net_forward.1} parent=11 // pred_check
          %p272 = pneg %p60
        $region18: #{semantic_net_forward.1} parent=11 // pred_check_branch
          %274 = sbr.rel (%p272) target = $region20
        $region19: #{semantic_net_forward.1} parent=11 // pred_region
          %s276 = ssub.s32 2048, 2048
          %277 = vsyncadd [#allocation3], %s276
          %s278 = sshll.u32 [#allocation2], 4
          %s279 = int_to_ptr.vmem [resolvable:$true] %s278
          %284 = dma.hbm_to_vmem [thread:$0]  %s1, 2048, %s279, [#allocation3], 64, 64, 4
        $region20: #{semantic_net_forward.1} parent=11 // pred_fallthru
          _
        // Predicated region
        $region21: #{semantic_net_forward.1} parent=11 // pred_check
          %p285 = pneg %p81
        $region22: #{semantic_net_forward.1} parent=11 // pred_check_branch
          %287 = sbr.rel (%p285) target = $region24
        $region23: #{semantic_net_forward.1} parent=11 // pred_region
          _
        $region24: #{semantic_net_forward.1} parent=11 // pred_fallthru
          _
        // Predicated region
        $region25: #{semantic_net_forward.1} parent=11 // pred_check
          %p288 = pneg %p102
        $region26: #{semantic_net_forward.1} parent=11 // pred_check_branch
          %290 = sbr.rel (%p288) target = $region28
        $region27: #{semantic_net_forward.1} parent=11 // pred_region
          _
        $region28: #{semantic_net_forward.1} parent=11 // pred_fallthru
          _
        // Predicated region
        $region29: #{semantic_net_forward.1} parent=11 // pred_check
          %p291 = pneg %p123
        $region30: #{semantic_net_forward.1} parent=11 // pred_check_branch
          %293 = sbr.rel (%p291) target = $region32
        $region31: #{semantic_net_forward.1} parent=11 // pred_region
          _
        $region32: #{semantic_net_forward.1} parent=11 // pred_fallthru
          _
        // Predicated region
        $region33: #{semantic_net_forward.1} parent=11 // pred_check
          %p294 = pneg %p144
        $region34: #{semantic_net_forward.1} parent=11 // pred_check_branch
          %296 = sbr.rel (%p294) target = $region36
        $region35: #{semantic_net_forward.1} parent=11 // pred_region
          _
        $region36: #{semantic_net_forward.1} parent=11 // pred_fallthru
          _
        // Predicated region
        $region37: #{semantic_net_forward.1} parent=11 // pred_check
          %p297 = pneg %p165
        $region38: #{semantic_net_forward.1} parent=11 // pred_check_branch
          %299 = sbr.rel (%p297) target = $region40
        $region39: #{semantic_net_forward.1} parent=11 // pred_region
          _
        $region40: #{semantic_net_forward.1} parent=11 // pred_fallthru
          _
        // Predicated region
        $region41: #{semantic_net_forward.1} parent=11 // pred_check
          %p300 = pneg %p186
        $region42: #{semantic_net_forward.1} parent=11 // pred_check_branch
          %302 = sbr.rel (%p300) target = $region44
        $region43: #{semantic_net_forward.1} parent=11 // pred_region
          _
        $region44: #{semantic_net_forward.1} parent=11 // pred_fallthru
          _
        // Predicated region
        $region45: #{semantic_net_forward.1} parent=11 // pred_check
          %p303 = pneg %p207
        $region46: #{semantic_net_forward.1} parent=11 // pred_check_branch
          %305 = sbr.rel (%p303) target = $region48
        $region47: #{semantic_net_forward.1} parent=11 // pred_region
          _
        $region48: #{semantic_net_forward.1} parent=11 // pred_fallthru
          _
        // Predicated region
        $region49: #{semantic_net_forward.1} parent=11 // pred_check
          %p306 = pneg %p228
        $region50: #{semantic_net_forward.1} parent=11 // pred_check_branch
          %308 = sbr.rel (%p306) target = $region52
        $region51: #{semantic_net_forward.1} parent=11 // pred_region
          %s310 = ssub.s32 64, 64
          %311 = vsyncadd [#allocation5], %s310
          %s313 = sshll.u32 [#allocation4], 4
          %s314 = int_to_ptr.vmem [resolvable:$true] %s313
          %316 = dma.hbm_to_vmem [thread:$0]  %s9, 64, %s314, [#allocation5]
        $region52: #{semantic_net_forward.1} parent=11 // pred_fallthru
          _
      $region12: #{semantic_net_forward.1} parent=5 // pred_fallthru
        _
      %p317 = scmp.lt.s32.totalorder %s18, 2
      // Predicated region
      $region53: #{semantic_net_forward.1} parent=5 // pred_check
        %p318 = pneg %p317
      $region54: #{semantic_net_forward.1} parent=5 // pred_check_branch
        %320 = sbr.rel (%p318) target = $region56
      $region55: #{semantic_net_forward.1} parent=5 // pred_region
        _
      $region56: #{semantic_net_forward.1} parent=5 // pred_fallthru
        _
      %p321 = scmp.le.s32.totalorder 1, %s18
      %p322 = scmp.lt.s32.totalorder %s18, 3
      %p323 = pnand %p321, %p322
      %p324 = pneg %p323
      // Predicated region
      $region57: #{semantic_net_forward.1} parent=5 // pred_check
        _
      $region58: #{semantic_net_forward.1} parent=5 // pred_check_branch
        %326 = sbr.rel (%p323) target = $region60
      $region59: #{semantic_net_forward.1} parent=5 // pred_region
        %s327 = ssub.s32 %s18, 1
        // Predicated region
        $region61: #{semantic_net_forward.1} parent=59 // pred_check
          %p328 = pneg %p60
        $region62: #{semantic_net_forward.1} parent=59 // pred_check_branch
          %330 = sbr.rel (%p328) target = $region64
        $region63: #{semantic_net_forward.1} parent=59 // pred_region
          %331 = dma.done [#allocation3], 2048
        $region64: #{semantic_net_forward.1} parent=59 // pred_fallthru
          _
        // Predicated region
        $region65: #{semantic_net_forward.1} parent=59 // pred_check
          %p332 = pneg %p228
        $region66: #{semantic_net_forward.1} parent=59 // pred_check_branch
          %334 = sbr.rel (%p332) target = $region68
        $region67: #{semantic_net_forward.1} parent=59 // pred_region
          %335 = dma.done [#allocation5], 64
        $region68: #{semantic_net_forward.1} parent=59 // pred_fallthru
          _
        %p336 = pneg %p39
        %p337 = pneg %p36
        %p338 = pneg %p60
        %p339 = pneg %p57
        %p340 = pneg %p81
        %p341 = pneg %p78
        %p342 = pneg %p102
        %p343 = pneg %p99
        %p344 = pneg %p123
        %p345 = pneg %p120
        %p346 = pneg %p144
        %p347 = pneg %p141
        %p348 = pneg %p165
        %p349 = pneg %p162
        %p350 = pneg %p186
        %p351 = pneg %p183
        %p352 = pneg %p207
        %p353 = pneg %p204
        %p354 = pneg %p228
        %p355 = pneg %p225
        %p356 = pneg %p254
        %p357 = pneg %p251
        %p358 = scmp.lt.s32.totalorder %s23, 1
        %s359 = scalar_select %p358, %s23, 1
        %s360 = smul.addr %s359, 4
        %s361 = smul.addr %s360, 2
        %s362 = scalar_lea.vmem %s10, %s361
        %p363 = scmp.lt.s32.totalorder %s23, 1
        %s364 = scalar_select %p363, %s23, 1
        %s365 = smul.addr %s364, 4
        %s366 = smul.addr %s365, 2
        %s367 = scalar_lea.vmem %s10, %s366
        %p369 = scmp.eq.s32.totalorder %s23, 0
        // Predicated region
        $region69: #{semantic_net_forward.1} parent=59 // pred_check
          %p370 = pneg %p369
        $region70: #{semantic_net_forward.1} parent=59 // pred_check_branch
          %372 = sbr.rel (%p370) target = $region72
        $region71: #{semantic_net_forward.1} parent=59 // pred_region
          %v373 = vld [vmem:[%s0] sm:$0xff]
          %v374 = vld [vmem:[%s0 + $0x8] sm:$0xff]
          %v375 = vld [vmem:[%s0 + $0x10] sm:$0xff]
          %v376 = vld [vmem:[%s0 + $0x18] sm:$0xff]
          %v377 = vld [vmem:[#allocation2] sm:$0xf]
          %v378 = vld [vmem:[#allocation2 + $0x4] sm:$0xf]
          %v379 = vld [vmem:[#allocation2 + $0x8] sm:$0xf]
          %v380 = vld [vmem:[#allocation2 + $0xc] sm:$0xf]
          %v381 = vld [vmem:[#allocation2 + $0x10] sm:$0xf]
          %v382 = vld [vmem:[#allocation2 + $0x14] sm:$0xf]
          %v383 = vld [vmem:[#allocation2 + $0x18] sm:$0xf]
          %v384 = vld [vmem:[#allocation2 + $0x1c] sm:$0xf]
          %v385 = vld [vmem:[#allocation2 + $0x20] sm:$0xf]
          %v386 = vld [vmem:[#allocation2 + $0x24] sm:$0xf]
          %v387 = vld [vmem:[#allocation2 + $0x28] sm:$0xf]
          %v388 = vld [vmem:[#allocation2 + $0x2c] sm:$0xf]
          %v389 = vld [vmem:[#allocation2 + $0x30] sm:$0xf]
          %v390 = vld [vmem:[#allocation2 + $0x34] sm:$0xf]
          %v391 = vld [vmem:[#allocation2 + $0x38] sm:$0xf]
          %v392 = vld [vmem:[#allocation2 + $0x3c] sm:$0xf]
          %v393 = vld [vmem:[#allocation2 + $0x40] sm:$0xf]
          %v394 = vld [vmem:[#allocation2 + $0x44] sm:$0xf]
          %v395 = vld [vmem:[#allocation2 + $0x48] sm:$0xf]
          %v396 = vld [vmem:[#allocation2 + $0x4c] sm:$0xf]
          %v397 = vld [vmem:[#allocation2 + $0x50] sm:$0xf]
          %v398 = vld [vmem:[#allocation2 + $0x54] sm:$0xf]
          %v399 = vld [vmem:[#allocation2 + $0x58] sm:$0xf]
          %v400 = vld [vmem:[#allocation2 + $0x5c] sm:$0xf]
          %v401 = vld [vmem:[#allocation2 + $0x60] sm:$0xf]
          %v402 = vld [vmem:[#allocation2 + $0x64] sm:$0xf]
          %v403 = vld [vmem:[#allocation2 + $0x68] sm:$0xf]
          %v404 = vld [vmem:[#allocation2 + $0x6c] sm:$0xf]
          %v405 = vld [vmem:[#allocation2 + $0x70] sm:$0xf]
          %v406 = vld [vmem:[#allocation2 + $0x74] sm:$0xf]
          %v407 = vld [vmem:[#allocation2 + $0x78] sm:$0xf]
          %v408 = vld [vmem:[#allocation2 + $0x7c] sm:$0xf]
          %v409 = vld [vmem:[%s2] sm:$0x1]
          %v411 = vlaneseq
          %v412 = vshrl.u32 %v411, 7
          %v413 = vsub.s32 0, %v412
          %v414 = vrot.slane %v409, %v413
          %v420 = vunpack.c.l.b16 %v373
          %v421 = vunpack.c.h.b16 %v373
          %v422 = vunpack.c.l.b16 %v374
          %v423 = vunpack.c.h.b16 %v374
          %v424 = vunpack.c.l.b16 %v375
          %v425 = vunpack.c.h.b16 %v375
          %v426 = vunpack.c.l.b16 %v376
          %v427 = vunpack.c.h.b16 %v376
          %v428 = vpack.c.b16 %v422, %v420
          %v429 = vpack.c.b16 %v423, %v421
          %v430 = vpack.c.b16 %v426, %v424
          %v431 = vpack.c.b16 %v427, %v425
          %v468 = vunpack.c.l.b16 %v377
          %v469 = vunpack.c.l.b16 %v378
          %v470 = vunpack.c.l.b16 %v379
          %v471 = vunpack.c.l.b16 %v380
          %v472 = vunpack.c.l.b16 %v381
          %v473 = vunpack.c.l.b16 %v382
          %v474 = vunpack.c.l.b16 %v383
          %v475 = vunpack.c.l.b16 %v384
          %v476 = vunpack.c.l.b16 %v385
          %v477 = vunpack.c.l.b16 %v386
          %v478 = vunpack.c.l.b16 %v387
          %v479 = vunpack.c.l.b16 %v388
          %v480 = vunpack.c.l.b16 %v389
          %v481 = vunpack.c.l.b16 %v390
          %v482 = vunpack.c.l.b16 %v391
          %v483 = vunpack.c.l.b16 %v392
          %v484 = vunpack.c.l.b16 %v393
          %v485 = vunpack.c.l.b16 %v394
          %v486 = vunpack.c.l.b16 %v395
          %v487 = vunpack.c.l.b16 %v396
          %v488 = vunpack.c.l.b16 %v397
          %v489 = vunpack.c.l.b16 %v398
          %v490 = vunpack.c.l.b16 %v399
          %v491 = vunpack.c.l.b16 %v400
          %v492 = vunpack.c.l.b16 %v401
          %v493 = vunpack.c.l.b16 %v402
          %v494 = vunpack.c.l.b16 %v403
          %v495 = vunpack.c.l.b16 %v404
          %v496 = vunpack.c.l.b16 %v405
          %v497 = vunpack.c.l.b16 %v406
          %v498 = vunpack.c.l.b16 %v407
          %v499 = vunpack.c.l.b16 %v408
          %v500 = vpack.c.b16 %v469, %v468
          %v501 = vpack.c.b16 %v471, %v470
          %v502 = vpack.c.b16 %v473, %v472
          %v503 = vpack.c.b16 %v475, %v474
          %v504 = vpack.c.b16 %v477, %v476
          %v505 = vpack.c.b16 %v479, %v478
          %v506 = vpack.c.b16 %v481, %v480
          %v507 = vpack.c.b16 %v483, %v482
          %v508 = vpack.c.b16 %v485, %v484
          %v509 = vpack.c.b16 %v487, %v486
          %v510 = vpack.c.b16 %v489, %v488
          %v511 = vpack.c.b16 %v491, %v490
          %v512 = vpack.c.b16 %v493, %v492
          %v513 = vpack.c.b16 %v495, %v494
          %v514 = vpack.c.b16 %v497, %v496
          %v515 = vpack.c.b16 %v499, %v498
          %532 = vmatprep.subr.bf16.mxu0 0
          %533 = vmatpush1.bf16.msra.mxu0 %v500
          %534 = vmatprep.subr.bf16.mxu0 0
          %535 = vmatpush1.bf16.msra.mxu0 %v501
          %536 = vmatprep.subr.bf16.mxu0 0
          %537 = vmatpush1.bf16.msra.mxu0 %v502
          %538 = vmatprep.subr.bf16.mxu0 0
          %539 = vmatpush1.bf16.msra.mxu0 %v503
          %540 = vmatprep.subr.bf16.mxu0 0
          %541 = vmatpush1.bf16.msra.mxu0 %v504
          %542 = vmatprep.subr.bf16.mxu0 0
          %543 = vmatpush1.bf16.msra.mxu0 %v505
          %544 = vmatprep.subr.bf16.mxu0 0
          %545 = vmatpush1.bf16.msra.mxu0 %v506
          %546 = vmatprep.subr.bf16.mxu0 0
          %547 = vmatpush1.bf16.msra.mxu0 %v507
          %548 = vmatprep.subr.bf16.mxu0 0
          %549 = vmatpush1.bf16.msra.mxu0 %v508
          %550 = vmatprep.subr.bf16.mxu0 0
          %551 = vmatpush1.bf16.msra.mxu0 %v509
          %552 = vmatprep.subr.bf16.mxu0 0
          %553 = vmatpush1.bf16.msra.mxu0 %v510
          %554 = vmatprep.subr.bf16.mxu0 0
          %555 = vmatpush1.bf16.msra.mxu0 %v511
          %556 = vmatprep.subr.bf16.mxu0 0
          %557 = vmatpush1.bf16.msra.mxu0 %v512
          %558 = vmatprep.subr.bf16.mxu0 0
          %559 = vmatpush1.bf16.msra.mxu0 %v513
          %560 = vmatprep.subr.bf16.mxu0 0
          %561 = vmatpush1.bf16.msra.mxu0 %v514
          %562 = vmatprep.subr.bf16.mxu0 0
          %563 = vmatpush1.bf16.msra.mxu0 %v515
          %564 = vmatprep.mubr.bf16.mxu0 %v429
          %565 = vmatmul.mubr.bf16.gmra.mrb[0].mxu0 %v428
          %v566 = vpop.f32.mrb[0].mxu0
          %v567 = vadd.f32 %v414, %v566
          %v568 = vpop.f32.mrb[0].mxu0
          %v569 = vpop.f32.mrb[0].mxu0
          %v570 = vadd.f32 %v414, %v569
          %v571 = vpop.f32.mrb[0].mxu0
          %572 = vmatprep.mubr.bf16.mxu0 %v431
          %573 = vmatmul.mubr.bf16.gmra.mrb[0].mxu0 %v430
          %v574 = vpop.f32.mrb[0].mxu0
          %v575 = vadd.f32 %v414, %v574
          %v576 = vpop.f32.mrb[0].mxu0
          %v577 = vpop.f32.mrb[0].mxu0
          %v578 = vadd.f32 %v414, %v577
          %v579 = vpop.f32.mrb[0].mxu0
          %580 = vdwg.mxu0
          %v581 = vmax.f32 %v567, 0.0
          %v582 = vmax.f32 %v570, 0.0
          %v583 = vmax.f32 %v575, 0.0
          %v584 = vmax.f32 %v578, 0.0
          %v585 = vadd.f32 %v581, %v582
          %v586 = vrot.slane %v585, 4
          %v587 = vadd.f32 %v585, %v586
          %v588 = vrot.slane %v587, 2
          %v589 = vadd.f32 %v587, %v588
          %v590 = vrot.slane %v589, 1
          %v591 = vadd.f32 %v589, %v590
          %v592 = vadd.f32 %v583, %v584
          %v593 = vrot.slane %v592, 4
          %v594 = vadd.f32 %v592, %v593
          %v595 = vrot.slane %v594, 2
          %v596 = vadd.f32 %v594, %v595
          %v597 = vrot.slane %v596, 1
          %v598 = vadd.f32 %v596, %v597
          %v599 = vpack.c.bf16 %v591, %v591
          %v600 = vpack.c.bf16 %v598, %v598
          %v601 = vld [vmem:[%s3] sm:$0xff]
          %v602 = vld [vmem:[%s3 + $0x8] sm:$0xff]
          %v603 = vld [vmem:[%s3 + $0x10] sm:$0xff]
          %v604 = vld [vmem:[%s3 + $0x18] sm:$0xff]
          %v605 = vld [vmem:[%s3 + $0x20] sm:$0xff]
          %v606 = vld [vmem:[%s3 + $0x28] sm:$0xff]
          %v607 = vld [vmem:[%s3 + $0x30] sm:$0xff]
          %v608 = vld [vmem:[%s3 + $0x38] sm:$0xff]
          %v609 = vld [vmem:[%s3 + $0x40] sm:$0xff]
          %v610 = vld [vmem:[%s3 + $0x48] sm:$0xff]
          %v611 = vld [vmem:[%s3 + $0x50] sm:$0xff]
          %v612 = vld [vmem:[%s3 + $0x58] sm:$0xff]
          %v613 = vld [vmem:[%s3 + $0x60] sm:$0xff]
          %v614 = vld [vmem:[%s3 + $0x68] sm:$0xff]
          %v615 = vld [vmem:[%s3 + $0x70] sm:$0xff]
          %v616 = vld [vmem:[%s3 + $0x78] sm:$0xff]
          %v617 = vld [vmem:[%s3 + $0x80] sm:$0xff]
          %v618 = vld [vmem:[%s3 + $0x88] sm:$0xff]
          %v619 = vld [vmem:[%s3 + $0x90] sm:$0xff]
          %v620 = vld [vmem:[%s3 + $0x98] sm:$0xff]
          %v621 = vld [vmem:[%s3 + $0xa0] sm:$0xff]
          %v622 = vld [vmem:[%s3 + $0xa8] sm:$0xff]
          %v623 = vld [vmem:[%s3 + $0xb0] sm:$0xff]
          %v624 = vld [vmem:[%s3 + $0xb8] sm:$0xff]
          %v625 = vld [vmem:[%s3 + $0xc0] sm:$0xff]
          %v626 = vld [vmem:[%s3 + $0xc8] sm:$0xff]
          %v627 = vld [vmem:[%s3 + $0xd0] sm:$0xff]
          %v628 = vld [vmem:[%s3 + $0xd8] sm:$0xff]
          %v629 = vld [vmem:[%s3 + $0xe0] sm:$0xff]
          %v630 = vld [vmem:[%s3 + $0xe8] sm:$0xff]
          %v631 = vld [vmem:[%s3 + $0xf0] sm:$0xff]
          %v632 = vld [vmem:[%s3 + $0xf8] sm:$0xff]
          %v633 = vld [vmem:[%s4] sm:$0xf]
          %v635 = vlaneseq
          %v636 = vshrl.u32 %v635, 7
          %v637 = vsub.s32 0, %v636
          %v638 = vrot.slane %v633, %v637
          %v639 = vlaneseq
          %v640 = vshrl.u32 %v639, 7
          %v641 = vsub.s32 1, %v640
          %v642 = vrot.slane %v633, %v641
          %v643 = vlaneseq
          %v644 = vshrl.u32 %v643, 7
          %v645 = vsub.s32 2, %v644
          %v646 = vrot.slane %v633, %v645
          %v647 = vlaneseq
          %v648 = vshrl.u32 %v647, 7
          %v649 = vsub.s32 3, %v648
          %v650 = vrot.slane %v633, %v649
          %v657 = vunpack.c.l.b16 %v599
          %v658 = vunpack.c.l.b16 %v600
          %vm659 = vcmask 1041409
          %v660 = vsel %vm659, %v658, %v657
          %v661 = vpack.c.b16 %v660, %v660
          %v695 = vunpack.c.l.b16 %v601
          %v696 = vunpack.c.h.b16 %v601
          %v697 = vunpack.c.l.b16 %v602
          %v698 = vunpack.c.h.b16 %v602
          %v699 = vunpack.c.l.b16 %v603
          %v700 = vunpack.c.h.b16 %v603
          %v701 = vunpack.c.l.b16 %v604
          %v702 = vunpack.c.h.b16 %v604
          %v703 = vunpack.c.l.b16 %v605
          %v704 = vunpack.c.h.b16 %v605
          %v705 = vunpack.c.l.b16 %v606
          %v706 = vunpack.c.h.b16 %v606
          %v707 = vunpack.c.l.b16 %v607
          %v708 = vunpack.c.h.b16 %v607
          %v709 = vunpack.c.l.b16 %v608
          %v710 = vunpack.c.h.b16 %v608
          %v711 = vunpack.c.l.b16 %v609
          %v712 = vunpack.c.h.b16 %v609
          %v713 = vunpack.c.l.b16 %v610
          %v714 = vunpack.c.h.b16 %v610
          %v715 = vunpack.c.l.b16 %v611
          %v716 = vunpack.c.h.b16 %v611
          %v717 = vunpack.c.l.b16 %v612
          %v718 = vunpack.c.h.b16 %v612
          %v719 = vunpack.c.l.b16 %v613
          %v720 = vunpack.c.h.b16 %v613
          %v721 = vunpack.c.l.b16 %v614
          %v722 = vunpack.c.h.b16 %v614
          %v723 = vunpack.c.l.b16 %v615
          %v724 = vunpack.c.h.b16 %v615
          %v725 = vunpack.c.l.b16 %v616
          %v726 = vunpack.c.h.b16 %v616
          %v727 = vunpack.c.l.b16 %v617
          %v728 = vunpack.c.h.b16 %v617
          %v729 = vunpack.c.l.b16 %v618
          %v730 = vunpack.c.h.b16 %v618
          %v731 = vunpack.c.l.b16 %v619
          %v732 = vunpack.c.h.b16 %v619
          %v733 = vunpack.c.l.b16 %v620
          %v734 = vunpack.c.h.b16 %v620
          %v735 = vunpack.c.l.b16 %v621
          %v736 = vunpack.c.h.b16 %v621
          %v737 = vunpack.c.l.b16 %v622
          %v738 = vunpack.c.h.b16 %v622
          %v739 = vunpack.c.l.b16 %v623
          %v740 = vunpack.c.h.b16 %v623
          %v741 = vunpack.c.l.b16 %v624
          %v742 = vunpack.c.h.b16 %v624
          %v743 = vunpack.c.l.b16 %v625
          %v744 = vunpack.c.h.b16 %v625
          %v745 = vunpack.c.l.b16 %v626
          %v746 = vunpack.c.h.b16 %v626
          %v747 = vunpack.c.l.b16 %v627
          %v748 = vunpack.c.h.b16 %v627
          %v749 = vunpack.c.l.b16 %v628
          %v750 = vunpack.c.h.b16 %v628
          %v751 = vunpack.c.l.b16 %v629
          %v752 = vunpack.c.h.b16 %v629
          %v753 = vunpack.c.l.b16 %v630
          %v754 = vunpack.c.h.b16 %v630
          %v755 = vunpack.c.l.b16 %v631
          %v756 = vunpack.c.h.b16 %v631
          %v757 = vunpack.c.l.b16 %v632
          %v758 = vunpack.c.h.b16 %v632
          %v759 = vpack.c.b16 %v699, %v695
          %v760 = vpack.c.b16 %v700, %v696
          %v761 = vpack.c.b16 %v701, %v697
          %v762 = vpack.c.b16 %v702, %v698
          %v763 = vpack.c.b16 %v707, %v703
          %v764 = vpack.c.b16 %v708, %v704
          %v765 = vpack.c.b16 %v709, %v705
          %v766 = vpack.c.b16 %v710, %v706
          %v767 = vpack.c.b16 %v715, %v711
          %v768 = vpack.c.b16 %v716, %v712
          %v769 = vpack.c.b16 %v717, %v713
          %v770 = vpack.c.b16 %v718, %v714
          %v771 = vpack.c.b16 %v723, %v719
          %v772 = vpack.c.b16 %v724, %v720
          %v773 = vpack.c.b16 %v725, %v721
          %v774 = vpack.c.b16 %v726, %v722
          %v775 = vpack.c.b16 %v731, %v727
          %v776 = vpack.c.b16 %v732, %v728
          %v777 = vpack.c.b16 %v733, %v729
          %v778 = vpack.c.b16 %v734, %v730
          %v779 = vpack.c.b16 %v739, %v735
          %v780 = vpack.c.b16 %v740, %v736
          %v781 = vpack.c.b16 %v741, %v737
          %v782 = vpack.c.b16 %v742, %v738
          %v783 = vpack.c.b16 %v747, %v743
          %v784 = vpack.c.b16 %v748, %v744
          %v785 = vpack.c.b16 %v749, %v745
          %v786 = vpack.c.b16 %v750, %v746
          %v787 = vpack.c.b16 %v755, %v751
          %v788 = vpack.c.b16 %v756, %v752
          %v789 = vpack.c.b16 %v757, %v753
          %v790 = vpack.c.b16 %v758, %v754
          %823 = vmatprep.subr.bf16.mxu0 %v760
          %824 = vmatpush1.bf16.msra.mxu0 %v759
          %825 = vmatprep.subr.bf16.mxu0 %v764
          %826 = vmatpush1.bf16.msra.mxu0 %v763
          %827 = vmatprep.subr.bf16.mxu0 %v768
          %828 = vmatpush1.bf16.msra.mxu0 %v767
          %829 = vmatprep.subr.bf16.mxu0 %v772
          %830 = vmatpush1.bf16.msra.mxu0 %v771
          %831 = vmatprep.subr.bf16.mxu0 %v776
          %832 = vmatpush1.bf16.msra.mxu0 %v775
          %833 = vmatprep.subr.bf16.mxu0 %v780
          %834 = vmatpush1.bf16.msra.mxu0 %v779
          %835 = vmatprep.subr.bf16.mxu0 %v784
          %836 = vmatpush1.bf16.msra.mxu0 %v783
          %837 = vmatprep.subr.bf16.mxu0 %v788
          %838 = vmatpush1.bf16.msra.mxu0 %v787
          %839 = vmatprep.subr.bf16.mxu0 0
          %840 = vmatpush1.bf16.msra.mxu0 0
          %841 = vmatprep.subr.bf16.mxu0 0
          %842 = vmatpush1.bf16.msra.mxu0 0
          %843 = vmatprep.subr.bf16.mxu0 0
          %844 = vmatpush1.bf16.msra.mxu0 0
          %845 = vmatprep.subr.bf16.mxu0 0
          %846 = vmatpush1.bf16.msra.mxu0 0
          %847 = vmatprep.subr.bf16.mxu0 0
          %848 = vmatpush1.bf16.msra.mxu0 0
          %849 = vmatprep.subr.bf16.mxu0 0
          %850 = vmatpush1.bf16.msra.mxu0 0
          %851 = vmatprep.subr.bf16.mxu0 0
          %852 = vmatpush1.bf16.msra.mxu0 0
          %853 = vmatprep.subr.bf16.mxu0 0
          %854 = vmatpush1.bf16.msra.mxu0 0
          %855 = vmatprep.mubr.bf16.mxu0 0
          %856 = vmatmul.mubr.bf16.gmra.mrb[0].mxu0 %v661
          %v857 = vpop.f32.mrb[0].mxu0
          %v858 = vadd.f32 %v638, %v857
          %v859 = vpop.f32.mrb[0].mxu0
          %v860 = vadd.f32 %v642, %v859
          %v861 = vpop.f32.mrb[0].mxu0
          %v862 = vpop.f32.mrb[0].mxu0
          %863 = vdwg.mxu0
          %864 = vmatprep.subr.bf16.mxu0 %v762
          %865 = vmatpush1.bf16.msra.mxu0 %v761
          %866 = vmatprep.subr.bf16.mxu0 %v766
          %867 = vmatpush1.bf16.msra.mxu0 %v765
          %868 = vmatprep.subr.bf16.mxu0 %v770
          %869 = vmatpush1.bf16.msra.mxu0 %v769
          %870 = vmatprep.subr.bf16.mxu0 %v774
          %871 = vmatpush1.bf16.msra.mxu0 %v773
          %872 = vmatprep.subr.bf16.mxu0 %v778
          %873 = vmatpush1.bf16.msra.mxu0 %v777
          %874 = vmatprep.subr.bf16.mxu0 %v782
          %875 = vmatpush1.bf16.msra.mxu0 %v781
          %876 = vmatprep.subr.bf16.mxu0 %v786
          %877 = vmatpush1.bf16.msra.mxu0 %v785
          %878 = vmatprep.subr.bf16.mxu0 %v790
          %879 = vmatpush1.bf16.msra.mxu0 %v789
          %880 = vmatprep.subr.bf16.mxu0 0
          %881 = vmatpush1.bf16.msra.mxu0 0
          %882 = vmatprep.subr.bf16.mxu0 0
          %883 = vmatpush1.bf16.msra.mxu0 0
          %884 = vmatprep.subr.bf16.mxu0 0
          %885 = vmatpush1.bf16.msra.mxu0 0
          %886 = vmatprep.subr.bf16.mxu0 0
          %887 = vmatpush1.bf16.msra.mxu0 0
          %888 = vmatprep.subr.bf16.mxu0 0
          %889 = vmatpush1.bf16.msra.mxu0 0
          %890 = vmatprep.subr.bf16.mxu0 0
          %891 = vmatpush1.bf16.msra.mxu0 0
          %892 = vmatprep.subr.bf16.mxu0 0
          %893 = vmatpush1.bf16.msra.mxu0 0
          %894 = vmatprep.subr.bf16.mxu0 0
          %895 = vmatpush1.bf16.msra.mxu0 0
          %896 = vmatprep.mubr.bf16.mxu0 0
          %897 = vmatmul.mubr.bf16.gmra.mrb[0].mxu0 %v661
          %v898 = vpop.f32.mrb[0].mxu0
          %v899 = vadd.f32 %v646, %v898
          %v900 = vpop.f32.mrb[0].mxu0
          %v901 = vadd.f32 %v650, %v900
          %v902 = vpop.f32.mrb[0].mxu0
          %v903 = vpop.f32.mrb[0].mxu0
          %904 = vdwg.mxu0
          %v909 = vcombine.low %v858, %v860
          %v910 = vcombine.low %v899, %v901
          %v912 = vunpack.c.l.s4 1983009808
          %v913 = vunpack.c.0.s8 %v912
          %v914 = vlaneseq
          %v915 = vshrl.u32 %v914, 7
          %v916 = vsub.s32 %v913, %v915
          %v917 = vrot.slane %v909, %v916
          %v919 = vunpack.c.l.s4 1983009808
          %v920 = vunpack.c.0.s8 %v919
          %v921 = vlaneseq
          %v922 = vshrl.u32 %v921, 7
          %v923 = vsub.s32 %v920, %v922
          %v924 = vrot.slane %v910, %v923
          %v925 = vcombine.low %v917, %v924
          %927 = vst [vmem:[%s367] sm:$0xff] %v925
        $region72: #{semantic_net_forward.1} parent=59 // pred_fallthru
          _
        %p928 = scmp.eq.s32.totalorder %s23, 1
        // Predicated region
        $region73: #{semantic_net_forward.1} parent=59 // pred_check
          %p929 = pneg %p928
        $region74: #{semantic_net_forward.1} parent=59 // pred_check_branch
          %931 = sbr.rel (%p929) target = $region76
        $region75: #{semantic_net_forward.1} parent=59 // pred_region
          %v932 = vld [vmem:[%s5] sm:$0x3]
          %v933 = vld [vmem:[%s6] sm:$0xff]
          %v934 = vld [vmem:[%s6 + $0x8] sm:$0xff]
          %v935 = vld [vmem:[%s6 + $0x10] sm:$0xff]
          %v936 = vld [vmem:[%s6 + $0x18] sm:$0xff]
          %v937 = vld [vmem:[%s6 + $0x20] sm:$0xff]
          %v938 = vld [vmem:[%s6 + $0x28] sm:$0xff]
          %v939 = vld [vmem:[%s6 + $0x30] sm:$0xff]
          %v940 = vld [vmem:[%s6 + $0x38] sm:$0xff]
          %v941 = vld [vmem:[%s6 + $0x40] sm:$0xff]
          %v942 = vld [vmem:[%s6 + $0x48] sm:$0xff]
          %v943 = vld [vmem:[%s6 + $0x50] sm:$0xff]
          %v944 = vld [vmem:[%s6 + $0x58] sm:$0xff]
          %v945 = vld [vmem:[%s6 + $0x60] sm:$0xff]
          %v946 = vld [vmem:[%s6 + $0x68] sm:$0xff]
          %v947 = vld [vmem:[%s6 + $0x70] sm:$0xff]
          %v948 = vld [vmem:[%s6 + $0x78] sm:$0xff]
          %v949 = vld [vmem:[%s6 + $0x80] sm:$0xff]
          %v950 = vld [vmem:[%s6 + $0x88] sm:$0xff]
          %v951 = vld [vmem:[%s6 + $0x90] sm:$0xff]
          %v952 = vld [vmem:[%s6 + $0x98] sm:$0xff]
          %v953 = vld [vmem:[%s6 + $0xa0] sm:$0xff]
          %v954 = vld [vmem:[%s6 + $0xa8] sm:$0xff]
          %v955 = vld [vmem:[%s6 + $0xb0] sm:$0xff]
          %v956 = vld [vmem:[%s6 + $0xb8] sm:$0xff]
          %v957 = vld [vmem:[%s6 + $0xc0] sm:$0xff]
          %v958 = vld [vmem:[%s6 + $0xc8] sm:$0xff]
          %v959 = vld [vmem:[%s6 + $0xd0] sm:$0xff]
          %v960 = vld [vmem:[%s6 + $0xd8] sm:$0xff]
          %v961 = vld [vmem:[%s6 + $0xe0] sm:$0xff]
          %v962 = vld [vmem:[%s6 + $0xe8] sm:$0xff]
          %v963 = vld [vmem:[%s6 + $0xf0] sm:$0xff]
          %v964 = vld [vmem:[%s6 + $0xf8] sm:$0xff]
          %v965 = vld [vmem:[%s6 + $0x100] sm:$0xff]
          %v966 = vld [vmem:[%s6 + $0x108] sm:$0xff]
          %v967 = vld [vmem:[%s6 + $0x110] sm:$0xff]
          %v968 = vld [vmem:[%s6 + $0x118] sm:$0xff]
          %v969 = vld [vmem:[%s6 + $0x120] sm:$0xff]
          %v970 = vld [vmem:[%s6 + $0x128] sm:$0xff]
          %v971 = vld [vmem:[%s6 + $0x130] sm:$0xff]
          %v972 = vld [vmem:[%s6 + $0x138] sm:$0xff]
          %v973 = vld [vmem:[%s6 + $0x140] sm:$0xff]
          %v974 = vld [vmem:[%s6 + $0x148] sm:$0xff]
          %v975 = vld [vmem:[%s6 + $0x150] sm:$0xff]
          %v976 = vld [vmem:[%s6 + $0x158] sm:$0xff]
          %v977 = vld [vmem:[%s6 + $0x160] sm:$0xff]
          %v978 = vld [vmem:[%s6 + $0x168] sm:$0xff]
          %v979 = vld [vmem:[%s6 + $0x170] sm:$0xff]
          %v980 = vld [vmem:[%s6 + $0x178] sm:$0xff]
          %v981 = vld [vmem:[%s6 + $0x180] sm:$0xff]
          %v982 = vld [vmem:[%s6 + $0x188] sm:$0xff]
          %v983 = vld [vmem:[%s6 + $0x190] sm:$0xff]
          %v984 = vld [vmem:[%s6 + $0x198] sm:$0xff]
          %v985 = vld [vmem:[%s6 + $0x1a0] sm:$0xff]
          %v986 = vld [vmem:[%s6 + $0x1a8] sm:$0xff]
          %v987 = vld [vmem:[%s6 + $0x1b0] sm:$0xff]
          %v988 = vld [vmem:[%s6 + $0x1b8] sm:$0xff]
          %v989 = vld [vmem:[%s6 + $0x1c0] sm:$0xff]
          %v990 = vld [vmem:[%s6 + $0x1c8] sm:$0xff]
          %v991 = vld [vmem:[%s6 + $0x1d0] sm:$0xff]
          %v992 = vld [vmem:[%s6 + $0x1d8] sm:$0xff]
          %v993 = vld [vmem:[%s6 + $0x1e0] sm:$0xff]
          %v994 = vld [vmem:[%s6 + $0x1e8] sm:$0xff]
          %v995 = vld [vmem:[%s6 + $0x1f0] sm:$0xff]
          %v996 = vld [vmem:[%s6 + $0x1f8] sm:$0xff]
          %v997 = vld [vmem:[%s7] sm:$0xf]
          %v999 = vlaneseq
          %v1000 = vshrl.u32 %v999, 7
          %v1001 = vsub.s32 0, %v1000
          %v1002 = vrot.slane %v997, %v1001
          %v1003 = vlaneseq
          %v1004 = vshrl.u32 %v1003, 7
          %v1005 = vsub.s32 1, %v1004
          %v1006 = vrot.slane %v997, %v1005
          %v1007 = vlaneseq
          %v1008 = vshrl.u32 %v1007, 7
          %v1009 = vsub.s32 2, %v1008
          %v1010 = vrot.slane %v997, %v1009
          %v1011 = vlaneseq
          %v1012 = vshrl.u32 %v1011, 7
          %v1013 = vsub.s32 3, %v1012
          %v1014 = vrot.slane %v997, %v1013
          %v1021 = vunpack.c.l.s4 1966171168
          %v1022 = vunpack.c.0.s8 %v1021
          %v1023 = vlaneseq
          %v1024 = vshrl.u32 %v1023, 7
          %v1025 = vsub.s32 %v1022, %v1024
          %v1026 = vrot.slane %v932, %v1025
          %v1027 = vcombine.high %v1026, %v1026
          %v1029 = vunpack.c.l.s4 1966171168
          %v1030 = vunpack.c.0.s8 %v1029
          %v1031 = vlaneseq
          %v1032 = vshrl.u32 %v1031, 7
          %v1033 = vsub.s32 %v1030, %v1032
          %v1034 = vrot.slane %v1026, %v1033
          %v1036 = vunpack.c.l.s4 1966171168
          %v1037 = vunpack.c.0.s8 %v1036
          %v1038 = vlaneseq
          %v1039 = vshrl.u32 %v1038, 7
          %v1040 = vsub.s32 %v1037, %v1039
          %v1041 = vrot.slane %v1027, %v1040
          %v1108 = vunpack.c.l.b16 %v933
          %v1109 = vunpack.c.h.b16 %v933
          %v1110 = vunpack.c.l.b16 %v934
          %v1111 = vunpack.c.h.b16 %v934
          %v1112 = vunpack.c.l.b16 %v935
          %v1113 = vunpack.c.h.b16 %v935
          %v1114 = vunpack.c.l.b16 %v936
          %v1115 = vunpack.c.h.b16 %v936
          %v1116 = vunpack.c.l.b16 %v937
          %v1117 = vunpack.c.h.b16 %v937
          %v1118 = vunpack.c.l.b16 %v938
          %v1119 = vunpack.c.h.b16 %v938
          %v1120 = vunpack.c.l.b16 %v939
          %v1121 = vunpack.c.h.b16 %v939
          %v1122 = vunpack.c.l.b16 %v940
          %v1123 = vunpack.c.h.b16 %v940
          %v1124 = vunpack.c.l.b16 %v941
          %v1125 = vunpack.c.h.b16 %v941
          %v1126 = vunpack.c.l.b16 %v942
          %v1127 = vunpack.c.h.b16 %v942
          %v1128 = vunpack.c.l.b16 %v943
          %v1129 = vunpack.c.h.b16 %v943
          %v1130 = vunpack.c.l.b16 %v944
          %v1131 = vunpack.c.h.b16 %v944
          %v1132 = vunpack.c.l.b16 %v945
          %v1133 = vunpack.c.h.b16 %v945
          %v1134 = vunpack.c.l.b16 %v946
          %v1135 = vunpack.c.h.b16 %v946
          %v1136 = vunpack.c.l.b16 %v947
          %v1137 = vunpack.c.h.b16 %v947
          %v1138 = vunpack.c.l.b16 %v948
          %v1139 = vunpack.c.h.b16 %v948
          %v1140 = vunpack.c.l.b16 %v949
          %v1141 = vunpack.c.h.b16 %v949
          %v1142 = vunpack.c.l.b16 %v950
          %v1143 = vunpack.c.h.b16 %v950
          %v1144 = vunpack.c.l.b16 %v951
          %v1145 = vunpack.c.h.b16 %v951
          %v1146 = vunpack.c.l.b16 %v952
          %v1147 = vunpack.c.h.b16 %v952
          %v1148 = vunpack.c.l.b16 %v953
          %v1149 = vunpack.c.h.b16 %v953
          %v1150 = vunpack.c.l.b16 %v954
          %v1151 = vunpack.c.h.b16 %v954
          %v1152 = vunpack.c.l.b16 %v955
          %v1153 = vunpack.c.h.b16 %v955
          %v1154 = vunpack.c.l.b16 %v956
          %v1155 = vunpack.c.h.b16 %v956
          %v1156 = vunpack.c.l.b16 %v957
          %v1157 = vunpack.c.h.b16 %v957
          %v1158 = vunpack.c.l.b16 %v958
          %v1159 = vunpack.c.h.b16 %v958
          %v1160 = vunpack.c.l.b16 %v959
          %v1161 = vunpack.c.h.b16 %v959
          %v1162 = vunpack.c.l.b16 %v960
          %v1163 = vunpack.c.h.b16 %v960
          %v1164 = vunpack.c.l.b16 %v961
          %v1165 = vunpack.c.h.b16 %v961
          %v1166 = vunpack.c.l.b16 %v962
          %v1167 = vunpack.c.h.b16 %v962
          %v1168 = vunpack.c.l.b16 %v963
          %v1169 = vunpack.c.h.b16 %v963
          %v1170 = vunpack.c.l.b16 %v964
          %v1171 = vunpack.c.h.b16 %v964
          %v1172 = vunpack.c.l.b16 %v965
          %v1173 = vunpack.c.h.b16 %v965
          %v1174 = vunpack.c.l.b16 %v966
          %v1175 = vunpack.c.h.b16 %v966
          %v1176 = vunpack.c.l.b16 %v967
          %v1177 = vunpack.c.h.b16 %v967
          %v1178 = vunpack.c.l.b16 %v968
          %v1179 = vunpack.c.h.b16 %v968
          %v1180 = vunpack.c.l.b16 %v969
          %v1181 = vunpack.c.h.b16 %v969
          %v1182 = vunpack.c.l.b16 %v970
          %v1183 = vunpack.c.h.b16 %v970
          %v1184 = vunpack.c.l.b16 %v971
          %v1185 = vunpack.c.h.b16 %v971
          %v1186 = vunpack.c.l.b16 %v972
          %v1187 = vunpack.c.h.b16 %v972
          %v1188 = vunpack.c.l.b16 %v973
          %v1189 = vunpack.c.h.b16 %v973
          %v1190 = vunpack.c.l.b16 %v974
          %v1191 = vunpack.c.h.b16 %v974
          %v1192 = vunpack.c.l.b16 %v975
          %v1193 = vunpack.c.h.b16 %v975
          %v1194 = vunpack.c.l.b16 %v976
          %v1195 = vunpack.c.h.b16 %v976
          %v1196 = vunpack.c.l.b16 %v977
          %v1197 = vunpack.c.h.b16 %v977
          %v1198 = vunpack.c.l.b16 %v978
          %v1199 = vunpack.c.h.b16 %v978
          %v1200 = vunpack.c.l.b16 %v979
          %v1201 = vunpack.c.h.b16 %v979
          %v1202 = vunpack.c.l.b16 %v980
          %v1203 = vunpack.c.h.b16 %v980
          %v1204 = vunpack.c.l.b16 %v981
          %v1205 = vunpack.c.h.b16 %v981
          %v1206 = vunpack.c.l.b16 %v982
          %v1207 = vunpack.c.h.b16 %v982
          %v1208 = vunpack.c.l.b16 %v983
          %v1209 = vunpack.c.h.b16 %v983
          %v1210 = vunpack.c.l.b16 %v984
          %v1211 = vunpack.c.h.b16 %v984
          %v1212 = vunpack.c.l.b16 %v985
          %v1213 = vunpack.c.h.b16 %v985
          %v1214 = vunpack.c.l.b16 %v986
          %v1215 = vunpack.c.h.b16 %v986
          %v1216 = vunpack.c.l.b16 %v987
          %v1217 = vunpack.c.h.b16 %v987
          %v1218 = vunpack.c.l.b16 %v988
          %v1219 = vunpack.c.h.b16 %v988
          %v1220 = vunpack.c.l.b16 %v989
          %v1221 = vunpack.c.h.b16 %v989
          %v1222 = vunpack.c.l.b16 %v990
          %v1223 = vunpack.c.h.b16 %v990
          %v1224 = vunpack.c.l.b16 %v991
          %v1225 = vunpack.c.h.b16 %v991
          %v1226 = vunpack.c.l.b16 %v992
          %v1227 = vunpack.c.h.b16 %v992
          %v1228 = vunpack.c.l.b16 %v993
          %v1229 = vunpack.c.h.b16 %v993
          %v1230 = vunpack.c.l.b16 %v994
          %v1231 = vunpack.c.h.b16 %v994
          %v1232 = vunpack.c.l.b16 %v995
          %v1233 = vunpack.c.h.b16 %v995
          %v1234 = vunpack.c.l.b16 %v996
          %v1235 = vunpack.c.h.b16 %v996
          %v1236 = vpack.c.b16 %v1112, %v1108
          %v1237 = vpack.c.b16 %v1113, %v1109
          %v1238 = vpack.c.b16 %v1114, %v1110
          %v1239 = vpack.c.b16 %v1115, %v1111
          %v1240 = vpack.c.b16 %v1120, %v1116
          %v1241 = vpack.c.b16 %v1121, %v1117
          %v1242 = vpack.c.b16 %v1122, %v1118
          %v1243 = vpack.c.b16 %v1123, %v1119
          %v1244 = vpack.c.b16 %v1128, %v1124
          %v1245 = vpack.c.b16 %v1129, %v1125
          %v1246 = vpack.c.b16 %v1130, %v1126
          %v1247 = vpack.c.b16 %v1131, %v1127
          %v1248 = vpack.c.b16 %v1136, %v1132
          %v1249 = vpack.c.b16 %v1137, %v1133
          %v1250 = vpack.c.b16 %v1138, %v1134
          %v1251 = vpack.c.b16 %v1139, %v1135
          %v1252 = vpack.c.b16 %v1144, %v1140
          %v1253 = vpack.c.b16 %v1145, %v1141
          %v1254 = vpack.c.b16 %v1146, %v1142
          %v1255 = vpack.c.b16 %v1147, %v1143
          %v1256 = vpack.c.b16 %v1152, %v1148
          %v1257 = vpack.c.b16 %v1153, %v1149
          %v1258 = vpack.c.b16 %v1154, %v1150
          %v1259 = vpack.c.b16 %v1155, %v1151
          %v1260 = vpack.c.b16 %v1160, %v1156
          %v1261 = vpack.c.b16 %v1161, %v1157
          %v1262 = vpack.c.b16 %v1162, %v1158
          %v1263 = vpack.c.b16 %v1163, %v1159
          %v1264 = vpack.c.b16 %v1168, %v1164
          %v1265 = vpack.c.b16 %v1169, %v1165
          %v1266 = vpack.c.b16 %v1170, %v1166
          %v1267 = vpack.c.b16 %v1171, %v1167
          %v1268 = vpack.c.b16 %v1176, %v1172
          %v1269 = vpack.c.b16 %v1177, %v1173
          %v1270 = vpack.c.b16 %v1178, %v1174
          %v1271 = vpack.c.b16 %v1179, %v1175
          %v1272 = vpack.c.b16 %v1184, %v1180
          %v1273 = vpack.c.b16 %v1185, %v1181
          %v1274 = vpack.c.b16 %v1186, %v1182
          %v1275 = vpack.c.b16 %v1187, %v1183
          %v1276 = vpack.c.b16 %v1192, %v1188
          %v1277 = vpack.c.b16 %v1193, %v1189
          %v1278 = vpack.c.b16 %v1194, %v1190
          %v1279 = vpack.c.b16 %v1195, %v1191
          %v1280 = vpack.c.b16 %v1200, %v1196
          %v1281 = vpack.c.b16 %v1201, %v1197
          %v1282 = vpack.c.b16 %v1202, %v1198
          %v1283 = vpack.c.b16 %v1203, %v1199
          %v1284 = vpack.c.b16 %v1208, %v1204
          %v1285 = vpack.c.b16 %v1209, %v1205
          %v1286 = vpack.c.b16 %v1210, %v1206
          %v1287 = vpack.c.b16 %v1211, %v1207
          %v1288 = vpack.c.b16 %v1216, %v1212
          %v1289 = vpack.c.b16 %v1217, %v1213
          %v1290 = vpack.c.b16 %v1218, %v1214
          %v1291 = vpack.c.b16 %v1219, %v1215
          %v1292 = vpack.c.b16 %v1224, %v1220
          %v1293 = vpack.c.b16 %v1225, %v1221
          %v1294 = vpack.c.b16 %v1226, %v1222
          %v1295 = vpack.c.b16 %v1227, %v1223
          %v1296 = vpack.c.b16 %v1232, %v1228
          %v1297 = vpack.c.b16 %v1233, %v1229
          %v1298 = vpack.c.b16 %v1234, %v1230
          %v1299 = vpack.c.b16 %v1235, %v1231
          %1364 = vmatprep.subr.bf16.mxu0 %v1237
          %1365 = vmatpush1.bf16.msra.mxu0 %v1236
          %1366 = vmatprep.subr.bf16.mxu0 %v1241
          %1367 = vmatpush1.bf16.msra.mxu0 %v1240
          %1368 = vmatprep.subr.bf16.mxu0 %v1245
          %1369 = vmatpush1.bf16.msra.mxu0 %v1244
          %1370 = vmatprep.subr.bf16.mxu0 %v1249
          %1371 = vmatpush1.bf16.msra.mxu0 %v1248
          %1372 = vmatprep.subr.bf16.mxu0 %v1253
          %1373 = vmatpush1.bf16.msra.mxu0 %v1252
          %1374 = vmatprep.subr.bf16.mxu0 %v1257
          %1375 = vmatpush1.bf16.msra.mxu0 %v1256
          %1376 = vmatprep.subr.bf16.mxu0 %v1261
          %1377 = vmatpush1.bf16.msra.mxu0 %v1260
          %1378 = vmatprep.subr.bf16.mxu0 %v1265
          %1379 = vmatpush1.bf16.msra.mxu0 %v1264
          %1380 = vmatprep.subr.bf16.mxu0 %v1269
          %1381 = vmatpush1.bf16.msra.mxu0 %v1268
          %1382 = vmatprep.subr.bf16.mxu0 %v1273
          %1383 = vmatpush1.bf16.msra.mxu0 %v1272
          %1384 = vmatprep.subr.bf16.mxu0 %v1277
          %1385 = vmatpush1.bf16.msra.mxu0 %v1276
          %1386 = vmatprep.subr.bf16.mxu0 %v1281
          %1387 = vmatpush1.bf16.msra.mxu0 %v1280
          %1388 = vmatprep.subr.bf16.mxu0 %v1285
          %1389 = vmatpush1.bf16.msra.mxu0 %v1284
          %1390 = vmatprep.subr.bf16.mxu0 %v1289
          %1391 = vmatpush1.bf16.msra.mxu0 %v1288
          %1392 = vmatprep.subr.bf16.mxu0 %v1293
          %1393 = vmatpush1.bf16.msra.mxu0 %v1292
          %1394 = vmatprep.subr.bf16.mxu0 %v1297
          %1395 = vmatpush1.bf16.msra.mxu0 %v1296
          %1396 = vmatprep.mubr.bf16.mxu0 %v1041
          %1397 = vmatmul.mubr.bf16.gmra.mrb[0].mxu0 %v1034
          %v1398 = vpop.f32.mrb[0].mxu0
          %v1399 = vadd.f32 %v1002, %v1398
          %v1400 = vpop.f32.mrb[0].mxu0
          %v1401 = vadd.f32 %v1006, %v1400
          %v1402 = vpop.f32.mrb[0].mxu0
          %v1403 = vpop.f32.mrb[0].mxu0
          %1404 = vdwg.mxu0
          %1405 = vmatprep.subr.bf16.mxu0 %v1239
          %1406 = vmatpush1.bf16.msra.mxu0 %v1238
          %1407 = vmatprep.subr.bf16.mxu0 %v1243
          %1408 = vmatpush1.bf16.msra.mxu0 %v1242
          %1409 = vmatprep.subr.bf16.mxu0 %v1247
          %1410 = vmatpush1.bf16.msra.mxu0 %v1246
          %1411 = vmatprep.subr.bf16.mxu0 %v1251
          %1412 = vmatpush1.bf16.msra.mxu0 %v1250
          %1413 = vmatprep.subr.bf16.mxu0 %v1255
          %1414 = vmatpush1.bf16.msra.mxu0 %v1254
          %1415 = vmatprep.subr.bf16.mxu0 %v1259
          %1416 = vmatpush1.bf16.msra.mxu0 %v1258
          %1417 = vmatprep.subr.bf16.mxu0 %v1263
          %1418 = vmatpush1.bf16.msra.mxu0 %v1262
          %1419 = vmatprep.subr.bf16.mxu0 %v1267
          %1420 = vmatpush1.bf16.msra.mxu0 %v1266
          %1421 = vmatprep.subr.bf16.mxu0 %v1271
          %1422 = vmatpush1.bf16.msra.mxu0 %v1270
          %1423 = vmatprep.subr.bf16.mxu0 %v1275
          %1424 = vmatpush1.bf16.msra.mxu0 %v1274
          %1425 = vmatprep.subr.bf16.mxu0 %v1279
          %1426 = vmatpush1.bf16.msra.mxu0 %v1278
          %1427 = vmatprep.subr.bf16.mxu0 %v1283
          %1428 = vmatpush1.bf16.msra.mxu0 %v1282
          %1429 = vmatprep.subr.bf16.mxu0 %v1287
          %1430 = vmatpush1.bf16.msra.mxu0 %v1286
          %1431 = vmatprep.subr.bf16.mxu0 %v1291
          %1432 = vmatpush1.bf16.msra.mxu0 %v1290
          %1433 = vmatprep.subr.bf16.mxu0 %v1295
          %1434 = vmatpush1.bf16.msra.mxu0 %v1294
          %1435 = vmatprep.subr.bf16.mxu0 %v1299
          %1436 = vmatpush1.bf16.msra.mxu0 %v1298
          %1437 = vmatprep.mubr.bf16.mxu0 %v1041
          %1438 = vmatmul.mubr.bf16.gmra.mrb[0].mxu0 %v1034
          %v1439 = vpop.f32.mrb[0].mxu0
          %v1440 = vadd.f32 %v1010, %v1439
          %v1441 = vpop.f32.mrb[0].mxu0
          %v1442 = vadd.f32 %v1014, %v1441
          %v1443 = vpop.f32.mrb[0].mxu0
          %v1444 = vpop.f32.mrb[0].mxu0
          %1445 = vdwg.mxu0
          %v1446 = vmax.f32 %v1399, 0.0
          %v1447 = vmax.f32 %v1401, 0.0
          %v1448 = vmax.f32 %v1440, 0.0
          %v1449 = vmax.f32 %v1442, 0.0
          %v1450 = vpack.c.bf16 %v1446, %v1446
          %v1451 = vpack.c.bf16 %v1447, %v1447
          %v1452 = vpack.c.bf16 %v1448, %v1448
          %v1453 = vpack.c.bf16 %v1449, %v1449
          %v1454 = vld [vmem:[%s8] sm:$0xff]
          %v1455 = vld [vmem:[%s8 + $0x8] sm:$0xff]
          %v1456 = vld [vmem:[%s8 + $0x10] sm:$0xff]
          %v1457 = vld [vmem:[%s8 + $0x18] sm:$0xff]
          %v1458 = vld [vmem:[%s8 + $0x20] sm:$0xff]
          %v1459 = vld [vmem:[%s8 + $0x28] sm:$0xff]
          %v1460 = vld [vmem:[%s8 + $0x30] sm:$0xff]
          %v1461 = vld [vmem:[%s8 + $0x38] sm:$0xff]
          %v1462 = vld [vmem:[%s8 + $0x40] sm:$0xff]
          %v1463 = vld [vmem:[%s8 + $0x48] sm:$0xff]
          %v1464 = vld [vmem:[%s8 + $0x50] sm:$0xff]
          %v1465 = vld [vmem:[%s8 + $0x58] sm:$0xff]
          %v1466 = vld [vmem:[%s8 + $0x60] sm:$0xff]
          %v1467 = vld [vmem:[%s8 + $0x68] sm:$0xff]
          %v1468 = vld [vmem:[%s8 + $0x70] sm:$0xff]
          %v1469 = vld [vmem:[%s8 + $0x78] sm:$0xff]
          %v1470 = vld [vmem:[%s8 + $0x80] sm:$0xff]
          %v1471 = vld [vmem:[%s8 + $0x88] sm:$0xff]
          %v1472 = vld [vmem:[%s8 + $0x90] sm:$0xff]
          %v1473 = vld [vmem:[%s8 + $0x98] sm:$0xff]
          %v1474 = vld [vmem:[%s8 + $0xa0] sm:$0xff]
          %v1475 = vld [vmem:[%s8 + $0xa8] sm:$0xff]
          %v1476 = vld [vmem:[%s8 + $0xb0] sm:$0xff]
          %v1477 = vld [vmem:[%s8 + $0xb8] sm:$0xff]
          %v1478 = vld [vmem:[%s8 + $0xc0] sm:$0xff]
          %v1479 = vld [vmem:[%s8 + $0xc8] sm:$0xff]
          %v1480 = vld [vmem:[%s8 + $0xd0] sm:$0xff]
          %v1481 = vld [vmem:[%s8 + $0xd8] sm:$0xff]
          %v1482 = vld [vmem:[%s8 + $0xe0] sm:$0xff]
          %v1483 = vld [vmem:[%s8 + $0xe8] sm:$0xff]
          %v1484 = vld [vmem:[%s8 + $0xf0] sm:$0xff]
          %v1485 = vld [vmem:[%s8 + $0xf8] sm:$0xff]
          %v1486 = vld [vmem:[%s8 + $0x100] sm:$0xff]
          %v1487 = vld [vmem:[%s8 + $0x108] sm:$0xff]
          %v1488 = vld [vmem:[%s8 + $0x110] sm:$0xff]
          %v1489 = vld [vmem:[%s8 + $0x118] sm:$0xff]
          %v1490 = vld [vmem:[%s8 + $0x120] sm:$0xff]
          %v1491 = vld [vmem:[%s8 + $0x128] sm:$0xff]
          %v1492 = vld [vmem:[%s8 + $0x130] sm:$0xff]
          %v1493 = vld [vmem:[%s8 + $0x138] sm:$0xff]
          %v1494 = vld [vmem:[%s8 + $0x140] sm:$0xff]
          %v1495 = vld [vmem:[%s8 + $0x148] sm:$0xff]
          %v1496 = vld [vmem:[%s8 + $0x150] sm:$0xff]
          %v1497 = vld [vmem:[%s8 + $0x158] sm:$0xff]
          %v1498 = vld [vmem:[%s8 + $0x160] sm:$0xff]
          %v1499 = vld [vmem:[%s8 + $0x168] sm:$0xff]
          %v1500 = vld [vmem:[%s8 + $0x170] sm:$0xff]
          %v1501 = vld [vmem:[%s8 + $0x178] sm:$0xff]
          %v1502 = vld [vmem:[%s8 + $0x180] sm:$0xff]
          %v1503 = vld [vmem:[%s8 + $0x188] sm:$0xff]
          %v1504 = vld [vmem:[%s8 + $0x190] sm:$0xff]
          %v1505 = vld [vmem:[%s8 + $0x198] sm:$0xff]
          %v1506 = vld [vmem:[%s8 + $0x1a0] sm:$0xff]
          %v1507 = vld [vmem:[%s8 + $0x1a8] sm:$0xff]
          %v1508 = vld [vmem:[%s8 + $0x1b0] sm:$0xff]
          %v1509 = vld [vmem:[%s8 + $0x1b8] sm:$0xff]
          %v1510 = vld [vmem:[%s8 + $0x1c0] sm:$0xff]
          %v1511 = vld [vmem:[%s8 + $0x1c8] sm:$0xff]
          %v1512 = vld [vmem:[%s8 + $0x1d0] sm:$0xff]
          %v1513 = vld [vmem:[%s8 + $0x1d8] sm:$0xff]
          %v1514 = vld [vmem:[%s8 + $0x1e0] sm:$0xff]
          %v1515 = vld [vmem:[%s8 + $0x1e8] sm:$0xff]
          %v1516 = vld [vmem:[%s8 + $0x1f0] sm:$0xff]
          %v1517 = vld [vmem:[%s8 + $0x1f8] sm:$0xff]
          %v1518 = vld [vmem:[%s8 + $0x200] sm:$0xff]
          %v1519 = vld [vmem:[%s8 + $0x208] sm:$0xff]
          %v1520 = vld [vmem:[%s8 + $0x210] sm:$0xff]
          %v1521 = vld [vmem:[%s8 + $0x218] sm:$0xff]
          %v1522 = vld [vmem:[%s8 + $0x220] sm:$0xff]
          %v1523 = vld [vmem:[%s8 + $0x228] sm:$0xff]
          %v1524 = vld [vmem:[%s8 + $0x230] sm:$0xff]
          %v1525 = vld [vmem:[%s8 + $0x238] sm:$0xff]
          %v1526 = vld [vmem:[%s8 + $0x240] sm:$0xff]
          %v1527 = vld [vmem:[%s8 + $0x248] sm:$0xff]
          %v1528 = vld [vmem:[%s8 + $0x250] sm:$0xff]
          %v1529 = vld [vmem:[%s8 + $0x258] sm:$0xff]
          %v1530 = vld [vmem:[%s8 + $0x260] sm:$0xff]
          %v1531 = vld [vmem:[%s8 + $0x268] sm:$0xff]
          %v1532 = vld [vmem:[%s8 + $0x270] sm:$0xff]
          %v1533 = vld [vmem:[%s8 + $0x278] sm:$0xff]
          %v1534 = vld [vmem:[%s8 + $0x280] sm:$0xff]
          %v1535 = vld [vmem:[%s8 + $0x288] sm:$0xff]
          %v1536 = vld [vmem:[%s8 + $0x290] sm:$0xff]
          %v1537 = vld [vmem:[%s8 + $0x298] sm:$0xff]
          %v1538 = vld [vmem:[%s8 + $0x2a0] sm:$0xff]
          %v1539 = vld [vmem:[%s8 + $0x2a8] sm:$0xff]
          %v1540 = vld [vmem:[%s8 + $0x2b0] sm:$0xff]
          %v1541 = vld [vmem:[%s8 + $0x2b8] sm:$0xff]
          %v1542 = vld [vmem:[%s8 + $0x2c0] sm:$0xff]
          %v1543 = vld [vmem:[%s8 + $0x2c8] sm:$0xff]
          %v1544 = vld [vmem:[%s8 + $0x2d0] sm:$0xff]
          %v1545 = vld [vmem:[%s8 + $0x2d8] sm:$0xff]
          %v1546 = vld [vmem:[%s8 + $0x2e0] sm:$0xff]
          %v1547 = vld [vmem:[%s8 + $0x2e8] sm:$0xff]
          %v1548 = vld [vmem:[%s8 + $0x2f0] sm:$0xff]
          %v1549 = vld [vmem:[%s8 + $0x2f8] sm:$0xff]
          %v1550 = vld [vmem:[%s8 + $0x300] sm:$0xff]
          %v1551 = vld [vmem:[%s8 + $0x308] sm:$0xff]
          %v1552 = vld [vmem:[%s8 + $0x310] sm:$0xff]
          %v1553 = vld [vmem:[%s8 + $0x318] sm:$0xff]
          %v1554 = vld [vmem:[%s8 + $0x320] sm:$0xff]
          %v1555 = vld [vmem:[%s8 + $0x328] sm:$0xff]
          %v1556 = vld [vmem:[%s8 + $0x330] sm:$0xff]
          %v1557 = vld [vmem:[%s8 + $0x338] sm:$0xff]
          %v1558 = vld [vmem:[%s8 + $0x340] sm:$0xff]
          %v1559 = vld [vmem:[%s8 + $0x348] sm:$0xff]
          %v1560 = vld [vmem:[%s8 + $0x350] sm:$0xff]
          %v1561 = vld [vmem:[%s8 + $0x358] sm:$0xff]
          %v1562 = vld [vmem:[%s8 + $0x360] sm:$0xff]
          %v1563 = vld [vmem:[%s8 + $0x368] sm:$0xff]
          %v1564 = vld [vmem:[%s8 + $0x370] sm:$0xff]
          %v1565 = vld [vmem:[%s8 + $0x378] sm:$0xff]
          %v1566 = vld [vmem:[%s8 + $0x380] sm:$0xff]
          %v1567 = vld [vmem:[%s8 + $0x388] sm:$0xff]
          %v1568 = vld [vmem:[%s8 + $0x390] sm:$0xff]
          %v1569 = vld [vmem:[%s8 + $0x398] sm:$0xff]
          %v1570 = vld [vmem:[%s8 + $0x3a0] sm:$0xff]
          %v1571 = vld [vmem:[%s8 + $0x3a8] sm:$0xff]
          %v1572 = vld [vmem:[%s8 + $0x3b0] sm:$0xff]
          %v1573 = vld [vmem:[%s8 + $0x3b8] sm:$0xff]
          %v1574 = vld [vmem:[%s8 + $0x3c0] sm:$0xff]
          %v1575 = vld [vmem:[%s8 + $0x3c8] sm:$0xff]
          %v1576 = vld [vmem:[%s8 + $0x3d0] sm:$0xff]
          %v1577 = vld [vmem:[%s8 + $0x3d8] sm:$0xff]
          %v1578 = vld [vmem:[%s8 + $0x3e0] sm:$0xff]
          %v1579 = vld [vmem:[%s8 + $0x3e8] sm:$0xff]
          %v1580 = vld [vmem:[%s8 + $0x3f0] sm:$0xff]
          %v1581 = vld [vmem:[%s8 + $0x3f8] sm:$0xff]
          %v1582 = vld [vmem:[#allocation4] sm:$0xf]
          %v1584 = vlaneseq
          %v1585 = vshrl.u32 %v1584, 7
          %v1586 = vsub.s32 0, %v1585
          %v1587 = vrot.slane %v1582, %v1586
          %v1588 = vlaneseq
          %v1589 = vshrl.u32 %v1588, 7
          %v1590 = vsub.s32 1, %v1589
          %v1591 = vrot.slane %v1582, %v1590
          %v1592 = vlaneseq
          %v1593 = vshrl.u32 %v1592, 7
          %v1594 = vsub.s32 2, %v1593
          %v1595 = vrot.slane %v1582, %v1594
          %v1596 = vlaneseq
          %v1597 = vshrl.u32 %v1596, 7
          %v1598 = vsub.s32 3, %v1597
          %v1599 = vrot.slane %v1582, %v1598
          %v1732 = vunpack.c.l.b16 %v1454
          %v1733 = vunpack.c.h.b16 %v1454
          %v1734 = vunpack.c.l.b16 %v1455
          %v1735 = vunpack.c.h.b16 %v1455
          %v1736 = vunpack.c.l.b16 %v1456
          %v1737 = vunpack.c.h.b16 %v1456
          %v1738 = vunpack.c.l.b16 %v1457
          %v1739 = vunpack.c.h.b16 %v1457
          %v1740 = vunpack.c.l.b16 %v1458
          %v1741 = vunpack.c.h.b16 %v1458
          %v1742 = vunpack.c.l.b16 %v1459
          %v1743 = vunpack.c.h.b16 %v1459
          %v1744 = vunpack.c.l.b16 %v1460
          %v1745 = vunpack.c.h.b16 %v1460
          %v1746 = vunpack.c.l.b16 %v1461
          %v1747 = vunpack.c.h.b16 %v1461
          %v1748 = vunpack.c.l.b16 %v1462
          %v1749 = vunpack.c.h.b16 %v1462
          %v1750 = vunpack.c.l.b16 %v1463
          %v1751 = vunpack.c.h.b16 %v1463
          %v1752 = vunpack.c.l.b16 %v1464
          %v1753 = vunpack.c.h.b16 %v1464
          %v1754 = vunpack.c.l.b16 %v1465
          %v1755 = vunpack.c.h.b16 %v1465
          %v1756 = vunpack.c.l.b16 %v1466
          %v1757 = vunpack.c.h.b16 %v1466
          %v1758 = vunpack.c.l.b16 %v1467
          %v1759 = vunpack.c.h.b16 %v1467
          %v1760 = vunpack.c.l.b16 %v1468
          %v1761 = vunpack.c.h.b16 %v1468
          %v1762 = vunpack.c.l.b16 %v1469
          %v1763 = vunpack.c.h.b16 %v1469
          %v1764 = vunpack.c.l.b16 %v1470
          %v1765 = vunpack.c.h.b16 %v1470
          %v1766 = vunpack.c.l.b16 %v1471
          %v1767 = vunpack.c.h.b16 %v1471
          %v1768 = vunpack.c.l.b16 %v1472
          %v1769 = vunpack.c.h.b16 %v1472
          %v1770 = vunpack.c.l.b16 %v1473
          %v1771 = vunpack.c.h.b16 %v1473
          %v1772 = vunpack.c.l.b16 %v1474
          %v1773 = vunpack.c.h.b16 %v1474
          %v1774 = vunpack.c.l.b16 %v1475
          %v1775 = vunpack.c.h.b16 %v1475
          %v1776 = vunpack.c.l.b16 %v1476
          %v1777 = vunpack.c.h.b16 %v1476
          %v1778 = vunpack.c.l.b16 %v1477
          %v1779 = vunpack.c.h.b16 %v1477
          %v1780 = vunpack.c.l.b16 %v1478
          %v1781 = vunpack.c.h.b16 %v1478
          %v1782 = vunpack.c.l.b16 %v1479
          %v1783 = vunpack.c.h.b16 %v1479
          %v1784 = vunpack.c.l.b16 %v1480
          %v1785 = vunpack.c.h.b16 %v1480
          %v1786 = vunpack.c.l.b16 %v1481
          %v1787 = vunpack.c.h.b16 %v1481
          %v1788 = vunpack.c.l.b16 %v1482
          %v1789 = vunpack.c.h.b16 %v1482
          %v1790 = vunpack.c.l.b16 %v1483
          %v1791 = vunpack.c.h.b16 %v1483
          %v1792 = vunpack.c.l.b16 %v1484
          %v1793 = vunpack.c.h.b16 %v1484
          %v1794 = vunpack.c.l.b16 %v1485
          %v1795 = vunpack.c.h.b16 %v1485
          %v1796 = vunpack.c.l.b16 %v1486
          %v1797 = vunpack.c.h.b16 %v1486
          %v1798 = vunpack.c.l.b16 %v1487
          %v1799 = vunpack.c.h.b16 %v1487
          %v1800 = vunpack.c.l.b16 %v1488
          %v1801 = vunpack.c.h.b16 %v1488
          %v1802 = vunpack.c.l.b16 %v1489
          %v1803 = vunpack.c.h.b16 %v1489
          %v1804 = vunpack.c.l.b16 %v1490
          %v1805 = vunpack.c.h.b16 %v1490
          %v1806 = vunpack.c.l.b16 %v1491
          %v1807 = vunpack.c.h.b16 %v1491
          %v1808 = vunpack.c.l.b16 %v1492
          %v1809 = vunpack.c.h.b16 %v1492
          %v1810 = vunpack.c.l.b16 %v1493
          %v1811 = vunpack.c.h.b16 %v1493
          %v1812 = vunpack.c.l.b16 %v1494
          %v1813 = vunpack.c.h.b16 %v1494
          %v1814 = vunpack.c.l.b16 %v1495
          %v1815 = vunpack.c.h.b16 %v1495
          %v1816 = vunpack.c.l.b16 %v1496
          %v1817 = vunpack.c.h.b16 %v1496
          %v1818 = vunpack.c.l.b16 %v1497
          %v1819 = vunpack.c.h.b16 %v1497
          %v1820 = vunpack.c.l.b16 %v1498
          %v1821 = vunpack.c.h.b16 %v1498
          %v1822 = vunpack.c.l.b16 %v1499
          %v1823 = vunpack.c.h.b16 %v1499
          %v1824 = vunpack.c.l.b16 %v1500
          %v1825 = vunpack.c.h.b16 %v1500
          %v1826 = vunpack.c.l.b16 %v1501
          %v1827 = vunpack.c.h.b16 %v1501
          %v1828 = vunpack.c.l.b16 %v1502
          %v1829 = vunpack.c.h.b16 %v1502
          %v1830 = vunpack.c.l.b16 %v1503
          %v1831 = vunpack.c.h.b16 %v1503
          %v1832 = vunpack.c.l.b16 %v1504
          %v1833 = vunpack.c.h.b16 %v1504
          %v1834 = vunpack.c.l.b16 %v1505
          %v1835 = vunpack.c.h.b16 %v1505
          %v1836 = vunpack.c.l.b16 %v1506
          %v1837 = vunpack.c.h.b16 %v1506
          %v1838 = vunpack.c.l.b16 %v1507
          %v1839 = vunpack.c.h.b16 %v1507
          %v1840 = vunpack.c.l.b16 %v1508
          %v1841 = vunpack.c.h.b16 %v1508
          %v1842 = vunpack.c.l.b16 %v1509
          %v1843 = vunpack.c.h.b16 %v1509
          %v1844 = vunpack.c.l.b16 %v1510
          %v1845 = vunpack.c.h.b16 %v1510
          %v1846 = vunpack.c.l.b16 %v1511
          %v1847 = vunpack.c.h.b16 %v1511
          %v1848 = vunpack.c.l.b16 %v1512
          %v1849 = vunpack.c.h.b16 %v1512
          %v1850 = vunpack.c.l.b16 %v1513
          %v1851 = vunpack.c.h.b16 %v1513
          %v1852 = vunpack.c.l.b16 %v1514
          %v1853 = vunpack.c.h.b16 %v1514
          %v1854 = vunpack.c.l.b16 %v1515
          %v1855 = vunpack.c.h.b16 %v1515
          %v1856 = vunpack.c.l.b16 %v1516
          %v1857 = vunpack.c.h.b16 %v1516
          %v1858 = vunpack.c.l.b16 %v1517
          %v1859 = vunpack.c.h.b16 %v1517
          %v1860 = vunpack.c.l.b16 %v1518
          %v1861 = vunpack.c.h.b16 %v1518
          %v1862 = vunpack.c.l.b16 %v1519
          %v1863 = vunpack.c.h.b16 %v1519
          %v1864 = vunpack.c.l.b16 %v1520
          %v1865 = vunpack.c.h.b16 %v1520
          %v1866 = vunpack.c.l.b16 %v1521
          %v1867 = vunpack.c.h.b16 %v1521
          %v1868 = vunpack.c.l.b16 %v1522
          %v1869 = vunpack.c.h.b16 %v1522
          %v1870 = vunpack.c.l.b16 %v1523
          %v1871 = vunpack.c.h.b16 %v1523
          %v1872 = vunpack.c.l.b16 %v1524
          %v1873 = vunpack.c.h.b16 %v1524
          %v1874 = vunpack.c.l.b16 %v1525
          %v1875 = vunpack.c.h.b16 %v1525
          %v1876 = vunpack.c.l.b16 %v1526
          %v1877 = vunpack.c.h.b16 %v1526
          %v1878 = vunpack.c.l.b16 %v1527
          %v1879 = vunpack.c.h.b16 %v1527
          %v1880 = vunpack.c.l.b16 %v1528
          %v1881 = vunpack.c.h.b16 %v1528
          %v1882 = vunpack.c.l.b16 %v1529
          %v1883 = vunpack.c.h.b16 %v1529
          %v1884 = vunpack.c.l.b16 %v1530
          %v1885 = vunpack.c.h.b16 %v1530
          %v1886 = vunpack.c.l.b16 %v1531
          %v1887 = vunpack.c.h.b16 %v1531
          %v1888 = vunpack.c.l.b16 %v1532
          %v1889 = vunpack.c.h.b16 %v1532
          %v1890 = vunpack.c.l.b16 %v1533
          %v1891 = vunpack.c.h.b16 %v1533
          %v1892 = vunpack.c.l.b16 %v1534
          %v1893 = vunpack.c.h.b16 %v1534
          %v1894 = vunpack.c.l.b16 %v1535
          %v1895 = vunpack.c.h.b16 %v1535
          %v1896 = vunpack.c.l.b16 %v1536
          %v1897 = vunpack.c.h.b16 %v1536
          %v1898 = vunpack.c.l.b16 %v1537
          %v1899 = vunpack.c.h.b16 %v1537
          %v1900 = vunpack.c.l.b16 %v1538
          %v1901 = vunpack.c.h.b16 %v1538
          %v1902 = vunpack.c.l.b16 %v1539
          %v1903 = vunpack.c.h.b16 %v1539
          %v1904 = vunpack.c.l.b16 %v1540
          %v1905 = vunpack.c.h.b16 %v1540
          %v1906 = vunpack.c.l.b16 %v1541
          %v1907 = vunpack.c.h.b16 %v1541
          %v1908 = vunpack.c.l.b16 %v1542
          %v1909 = vunpack.c.h.b16 %v1542
          %v1910 = vunpack.c.l.b16 %v1543
          %v1911 = vunpack.c.h.b16 %v1543
          %v1912 = vunpack.c.l.b16 %v1544
          %v1913 = vunpack.c.h.b16 %v1544
          %v1914 = vunpack.c.l.b16 %v1545
          %v1915 = vunpack.c.h.b16 %v1545
          %v1916 = vunpack.c.l.b16 %v1546
          %v1917 = vunpack.c.h.b16 %v1546
          %v1918 = vunpack.c.l.b16 %v1547
          %v1919 = vunpack.c.h.b16 %v1547
          %v1920 = vunpack.c.l.b16 %v1548
          %v1921 = vunpack.c.h.b16 %v1548
          %v1922 = vunpack.c.l.b16 %v1549
          %v1923 = vunpack.c.h.b16 %v1549
          %v1924 = vunpack.c.l.b16 %v1550
          %v1925 = vunpack.c.h.b16 %v1550
          %v1926 = vunpack.c.l.b16 %v1551
          %v1927 = vunpack.c.h.b16 %v1551
          %v1928 = vunpack.c.l.b16 %v1552
          %v1929 = vunpack.c.h.b16 %v1552
          %v1930 = vunpack.c.l.b16 %v1553
          %v1931 = vunpack.c.h.b16 %v1553
          %v1932 = vunpack.c.l.b16 %v1554
          %v1933 = vunpack.c.h.b16 %v1554
          %v1934 = vunpack.c.l.b16 %v1555
          %v1935 = vunpack.c.h.b16 %v1555
          %v1936 = vunpack.c.l.b16 %v1556
          %v1937 = vunpack.c.h.b16 %v1556
          %v1938 = vunpack.c.l.b16 %v1557
          %v1939 = vunpack.c.h.b16 %v1557
          %v1940 = vunpack.c.l.b16 %v1558
          %v1941 = vunpack.c.h.b16 %v1558
          %v1942 = vunpack.c.l.b16 %v1559
          %v1943 = vunpack.c.h.b16 %v1559
          %v1944 = vunpack.c.l.b16 %v1560
          %v1945 = vunpack.c.h.b16 %v1560
          %v1946 = vunpack.c.l.b16 %v1561
          %v1947 = vunpack.c.h.b16 %v1561
          %v1948 = vunpack.c.l.b16 %v1562
          %v1949 = vunpack.c.h.b16 %v1562
          %v1950 = vunpack.c.l.b16 %v1563
          %v1951 = vunpack.c.h.b16 %v1563
          %v1952 = vunpack.c.l.b16 %v1564
          %v1953 = vunpack.c.h.b16 %v1564
          %v1954 = vunpack.c.l.b16 %v1565
          %v1955 = vunpack.c.h.b16 %v1565
          %v1956 = vunpack.c.l.b16 %v1566
          %v1957 = vunpack.c.h.b16 %v1566
          %v1958 = vunpack.c.l.b16 %v1567
          %v1959 = vunpack.c.h.b16 %v1567
          %v1960 = vunpack.c.l.b16 %v1568
          %v1961 = vunpack.c.h.b16 %v1568
          %v1962 = vunpack.c.l.b16 %v1569
          %v1963 = vunpack.c.h.b16 %v1569
          %v1964 = vunpack.c.l.b16 %v1570
          %v1965 = vunpack.c.h.b16 %v1570
          %v1966 = vunpack.c.l.b16 %v1571
          %v1967 = vunpack.c.h.b16 %v1571
          %v1968 = vunpack.c.l.b16 %v1572
          %v1969 = vunpack.c.h.b16 %v1572
          %v1970 = vunpack.c.l.b16 %v1573
          %v1971 = vunpack.c.h.b16 %v1573
          %v1972 = vunpack.c.l.b16 %v1574
          %v1973 = vunpack.c.h.b16 %v1574
          %v1974 = vunpack.c.l.b16 %v1575
          %v1975 = vunpack.c.h.b16 %v1575
          %v1976 = vunpack.c.l.b16 %v1576
          %v1977 = vunpack.c.h.b16 %v1576
          %v1978 = vunpack.c.l.b16 %v1577
          %v1979 = vunpack.c.h.b16 %v1577
          %v1980 = vunpack.c.l.b16 %v1578
          %v1981 = vunpack.c.h.b16 %v1578
          %v1982 = vunpack.c.l.b16 %v1579
          %v1983 = vunpack.c.h.b16 %v1579
          %v1984 = vunpack.c.l.b16 %v1580
          %v1985 = vunpack.c.h.b16 %v1580
          %v1986 = vunpack.c.l.b16 %v1581
          %v1987 = vunpack.c.h.b16 %v1581
          %v1988 = vpack.c.b16 %v1736, %v1732
          %v1989 = vpack.c.b16 %v1737, %v1733
          %v1990 = vpack.c.b16 %v1738, %v1734
          %v1991 = vpack.c.b16 %v1739, %v1735
          %v1992 = vpack.c.b16 %v1744, %v1740
          %v1993 = vpack.c.b16 %v1745, %v1741
          %v1994 = vpack.c.b16 %v1746, %v1742
          %v1995 = vpack.c.b16 %v1747, %v1743
          %v1996 = vpack.c.b16 %v1752, %v1748
          %v1997 = vpack.c.b16 %v1753, %v1749
          %v1998 = vpack.c.b16 %v1754, %v1750
          %v1999 = vpack.c.b16 %v1755, %v1751
          %v2000 = vpack.c.b16 %v1760, %v1756
          %v2001 = vpack.c.b16 %v1761, %v1757
          %v2002 = vpack.c.b16 %v1762, %v1758
          %v2003 = vpack.c.b16 %v1763, %v1759
          %v2004 = vpack.c.b16 %v1768, %v1764
          %v2005 = vpack.c.b16 %v1769, %v1765
          %v2006 = vpack.c.b16 %v1770, %v1766
          %v2007 = vpack.c.b16 %v1771, %v1767
          %v2008 = vpack.c.b16 %v1776, %v1772
          %v2009 = vpack.c.b16 %v1777, %v1773
          %v2010 = vpack.c.b16 %v1778, %v1774
          %v2011 = vpack.c.b16 %v1779, %v1775
          %v2012 = vpack.c.b16 %v1784, %v1780
          %v2013 = vpack.c.b16 %v1785, %v1781
          %v2014 = vpack.c.b16 %v1786, %v1782
          %v2015 = vpack.c.b16 %v1787, %v1783
          %v2016 = vpack.c.b16 %v1792, %v1788
          %v2017 = vpack.c.b16 %v1793, %v1789
          %v2018 = vpack.c.b16 %v1794, %v1790
          %v2019 = vpack.c.b16 %v1795, %v1791
          %v2020 = vpack.c.b16 %v1800, %v1796
          %v2021 = vpack.c.b16 %v1801, %v1797
          %v2022 = vpack.c.b16 %v1802, %v1798
          %v2023 = vpack.c.b16 %v1803, %v1799
          %v2024 = vpack.c.b16 %v1808, %v1804
          %v2025 = vpack.c.b16 %v1809, %v1805
          %v2026 = vpack.c.b16 %v1810, %v1806
          %v2027 = vpack.c.b16 %v1811, %v1807
          %v2028 = vpack.c.b16 %v1816, %v1812
          %v2029 = vpack.c.b16 %v1817, %v1813
          %v2030 = vpack.c.b16 %v1818, %v1814
          %v2031 = vpack.c.b16 %v1819, %v1815
          %v2032 = vpack.c.b16 %v1824, %v1820
          %v2033 = vpack.c.b16 %v1825, %v1821
          %v2034 = vpack.c.b16 %v1826, %v1822
          %v2035 = vpack.c.b16 %v1827, %v1823
          %v2036 = vpack.c.b16 %v1832, %v1828
          %v2037 = vpack.c.b16 %v1833, %v1829
          %v2038 = vpack.c.b16 %v1834, %v1830
          %v2039 = vpack.c.b16 %v1835, %v1831
          %v2040 = vpack.c.b16 %v1840, %v1836
          %v2041 = vpack.c.b16 %v1841, %v1837
          %v2042 = vpack.c.b16 %v1842, %v1838
          %v2043 = vpack.c.b16 %v1843, %v1839
          %v2044 = vpack.c.b16 %v1848, %v1844
          %v2045 = vpack.c.b16 %v1849, %v1845
          %v2046 = vpack.c.b16 %v1850, %v1846
          %v2047 = vpack.c.b16 %v1851, %v1847
          %v2048 = vpack.c.b16 %v1856, %v1852
          %v2049 = vpack.c.b16 %v1857, %v1853
          %v2050 = vpack.c.b16 %v1858, %v1854
          %v2051 = vpack.c.b16 %v1859, %v1855
          %v2052 = vpack.c.b16 %v1864, %v1860
          %v2053 = vpack.c.b16 %v1865, %v1861
          %v2054 = vpack.c.b16 %v1866, %v1862
          %v2055 = vpack.c.b16 %v1867, %v1863
          %v2056 = vpack.c.b16 %v1872, %v1868
          %v2057 = vpack.c.b16 %v1873, %v1869
          %v2058 = vpack.c.b16 %v1874, %v1870
          %v2059 = vpack.c.b16 %v1875, %v1871
          %v2060 = vpack.c.b16 %v1880, %v1876
          %v2061 = vpack.c.b16 %v1881, %v1877
          %v2062 = vpack.c.b16 %v1882, %v1878
          %v2063 = vpack.c.b16 %v1883, %v1879
          %v2064 = vpack.c.b16 %v1888, %v1884
          %v2065 = vpack.c.b16 %v1889, %v1885
          %v2066 = vpack.c.b16 %v1890, %v1886
          %v2067 = vpack.c.b16 %v1891, %v1887
          %v2068 = vpack.c.b16 %v1896, %v1892
          %v2069 = vpack.c.b16 %v1897, %v1893
          %v2070 = vpack.c.b16 %v1898, %v1894
          %v2071 = vpack.c.b16 %v1899, %v1895
          %v2072 = vpack.c.b16 %v1904, %v1900
          %v2073 = vpack.c.b16 %v1905, %v1901
          %v2074 = vpack.c.b16 %v1906, %v1902
          %v2075 = vpack.c.b16 %v1907, %v1903
          %v2076 = vpack.c.b16 %v1912, %v1908
          %v2077 = vpack.c.b16 %v1913, %v1909
          %v2078 = vpack.c.b16 %v1914, %v1910
          %v2079 = vpack.c.b16 %v1915, %v1911
          %v2080 = vpack.c.b16 %v1920, %v1916
          %v2081 = vpack.c.b16 %v1921, %v1917
          %v2082 = vpack.c.b16 %v1922, %v1918
          %v2083 = vpack.c.b16 %v1923, %v1919
          %v2084 = vpack.c.b16 %v1928, %v1924
          %v2085 = vpack.c.b16 %v1929, %v1925
          %v2086 = vpack.c.b16 %v1930, %v1926
          %v2087 = vpack.c.b16 %v1931, %v1927
          %v2088 = vpack.c.b16 %v1936, %v1932
          %v2089 = vpack.c.b16 %v1937, %v1933
          %v2090 = vpack.c.b16 %v1938, %v1934
          %v2091 = vpack.c.b16 %v1939, %v1935
          %v2092 = vpack.c.b16 %v1944, %v1940
          %v2093 = vpack.c.b16 %v1945, %v1941
          %v2094 = vpack.c.b16 %v1946, %v1942
          %v2095 = vpack.c.b16 %v1947, %v1943
          %v2096 = vpack.c.b16 %v1952, %v1948
          %v2097 = vpack.c.b16 %v1953, %v1949
          %v2098 = vpack.c.b16 %v1954, %v1950
          %v2099 = vpack.c.b16 %v1955, %v1951
          %v2100 = vpack.c.b16 %v1960, %v1956
          %v2101 = vpack.c.b16 %v1961, %v1957
          %v2102 = vpack.c.b16 %v1962, %v1958
          %v2103 = vpack.c.b16 %v1963, %v1959
          %v2104 = vpack.c.b16 %v1968, %v1964
          %v2105 = vpack.c.b16 %v1969, %v1965
          %v2106 = vpack.c.b16 %v1970, %v1966
          %v2107 = vpack.c.b16 %v1971, %v1967
          %v2108 = vpack.c.b16 %v1976, %v1972
          %v2109 = vpack.c.b16 %v1977, %v1973
          %v2110 = vpack.c.b16 %v1978, %v1974
          %v2111 = vpack.c.b16 %v1979, %v1975
          %v2112 = vpack.c.b16 %v1984, %v1980
          %v2113 = vpack.c.b16 %v1985, %v1981
          %v2114 = vpack.c.b16 %v1986, %v1982
          %v2115 = vpack.c.b16 %v1987, %v1983
          %2244 = vmatprep.subr.bf16.mxu0 %v1989
          %2245 = vmatpush1.bf16.msra.mxu0 %v1988
          %2246 = vmatprep.subr.bf16.mxu0 %v1993
          %2247 = vmatpush1.bf16.msra.mxu0 %v1992
          %2248 = vmatprep.subr.bf16.mxu0 %v1997
          %2249 = vmatpush1.bf16.msra.mxu0 %v1996
          %2250 = vmatprep.subr.bf16.mxu0 %v2001
          %2251 = vmatpush1.bf16.msra.mxu0 %v2000
          %2252 = vmatprep.subr.bf16.mxu0 %v2005
          %2253 = vmatpush1.bf16.msra.mxu0 %v2004
          %2254 = vmatprep.subr.bf16.mxu0 %v2009
          %2255 = vmatpush1.bf16.msra.mxu0 %v2008
          %2256 = vmatprep.subr.bf16.mxu0 %v2013
          %2257 = vmatpush1.bf16.msra.mxu0 %v2012
          %2258 = vmatprep.subr.bf16.mxu0 %v2017
          %2259 = vmatpush1.bf16.msra.mxu0 %v2016
          %2260 = vmatprep.subr.bf16.mxu0 %v2021
          %2261 = vmatpush1.bf16.msra.mxu0 %v2020
          %2262 = vmatprep.subr.bf16.mxu0 %v2025
          %2263 = vmatpush1.bf16.msra.mxu0 %v2024
          %2264 = vmatprep.subr.bf16.mxu0 %v2029
          %2265 = vmatpush1.bf16.msra.mxu0 %v2028
          %2266 = vmatprep.subr.bf16.mxu0 %v2033
          %2267 = vmatpush1.bf16.msra.mxu0 %v2032
          %2268 = vmatprep.subr.bf16.mxu0 %v2037
          %2269 = vmatpush1.bf16.msra.mxu0 %v2036
          %2270 = vmatprep.subr.bf16.mxu0 %v2041
          %2271 = vmatpush1.bf16.msra.mxu0 %v2040
          %2272 = vmatprep.subr.bf16.mxu0 %v2045
          %2273 = vmatpush1.bf16.msra.mxu0 %v2044
          %2274 = vmatprep.subr.bf16.mxu0 %v2049
          %2275 = vmatpush1.bf16.msra.mxu0 %v2048
          %2276 = vmatprep.mubr.bf16.mxu0 %v1451
          %2277 = vmatmul.mubr.bf16.gmra.mrb[0].mxu0 %v1450
          %v2278 = vpop.f32.mrb[0].mxu0
          %v2279 = vadd.f32 %v1587, %v2278
          %v2280 = vpop.f32.mrb[0].mxu0
          %v2281 = vadd.f32 %v1591, %v2280
          %v2282 = vpop.f32.mrb[0].mxu0
          %v2283 = vpop.f32.mrb[0].mxu0
          %2284 = vdwg.mxu0
          %2285 = vmatprep.subr.bf16.mxu0 %v2053
          %2286 = vmatpush1.bf16.msra.mxu0 %v2052
          %2287 = vmatprep.subr.bf16.mxu0 %v2057
          %2288 = vmatpush1.bf16.msra.mxu0 %v2056
          %2289 = vmatprep.subr.bf16.mxu0 %v2061
          %2290 = vmatpush1.bf16.msra.mxu0 %v2060
          %2291 = vmatprep.subr.bf16.mxu0 %v2065
          %2292 = vmatpush1.bf16.msra.mxu0 %v2064
          %2293 = vmatprep.subr.bf16.mxu0 %v2069
          %2294 = vmatpush1.bf16.msra.mxu0 %v2068
          %2295 = vmatprep.subr.bf16.mxu0 %v2073
          %2296 = vmatpush1.bf16.msra.mxu0 %v2072
          %2297 = vmatprep.subr.bf16.mxu0 %v2077
          %2298 = vmatpush1.bf16.msra.mxu0 %v2076
          %2299 = vmatprep.subr.bf16.mxu0 %v2081
          %2300 = vmatpush1.bf16.msra.mxu0 %v2080
          %2301 = vmatprep.subr.bf16.mxu0 %v2085
          %2302 = vmatpush1.bf16.msra.mxu0 %v2084
          %2303 = vmatprep.subr.bf16.mxu0 %v2089
          %2304 = vmatpush1.bf16.msra.mxu0 %v2088
          %2305 = vmatprep.subr.bf16.mxu0 %v2093
          %2306 = vmatpush1.bf16.msra.mxu0 %v2092
          %2307 = vmatprep.subr.bf16.mxu0 %v2097
          %2308 = vmatpush1.bf16.msra.mxu0 %v2096
          %2309 = vmatprep.subr.bf16.mxu0 %v2101
          %2310 = vmatpush1.bf16.msra.mxu0 %v2100
          %2311 = vmatprep.subr.bf16.mxu0 %v2105
          %2312 = vmatpush1.bf16.msra.mxu0 %v2104
          %2313 = vmatprep.subr.bf16.mxu0 %v2109
          %2314 = vmatpush1.bf16.msra.mxu0 %v2108
          %2315 = vmatprep.subr.bf16.mxu0 %v2113
          %2316 = vmatpush1.bf16.msra.mxu0 %v2112
          %2317 = vmatprep.mubr.bf16.mxu0 %v1453
          %2318 = vmatmul.mubr.bf16.gmra.mrb[0].mxu0 %v1452
          %v2319 = vpop.f32.mrb[0].mxu0
          %v2320 = vadd.f32 %v2279, %v2319
          %v2321 = vpop.f32.mrb[0].mxu0
          %v2322 = vadd.f32 %v2281, %v2321
          %v2323 = vpop.f32.mrb[0].mxu0
          %v2324 = vpop.f32.mrb[0].mxu0
          %2325 = vdwg.mxu0
          %2326 = vmatprep.subr.bf16.mxu0 %v1991
          %2327 = vmatpush1.bf16.msra.mxu0 %v1990
          %2328 = vmatprep.subr.bf16.mxu0 %v1995
          %2329 = vmatpush1.bf16.msra.mxu0 %v1994
          %2330 = vmatprep.subr.bf16.mxu0 %v1999
          %2331 = vmatpush1.bf16.msra.mxu0 %v1998
          %2332 = vmatprep.subr.bf16.mxu0 %v2003
          %2333 = vmatpush1.bf16.msra.mxu0 %v2002
          %2334 = vmatprep.subr.bf16.mxu0 %v2007
          %2335 = vmatpush1.bf16.msra.mxu0 %v2006
          %2336 = vmatprep.subr.bf16.mxu0 %v2011
          %2337 = vmatpush1.bf16.msra.mxu0 %v2010
          %2338 = vmatprep.subr.bf16.mxu0 %v2015
          %2339 = vmatpush1.bf16.msra.mxu0 %v2014
          %2340 = vmatprep.subr.bf16.mxu0 %v2019
          %2341 = vmatpush1.bf16.msra.mxu0 %v2018
          %2342 = vmatprep.subr.bf16.mxu0 %v2023
          %2343 = vmatpush1.bf16.msra.mxu0 %v2022
          %2344 = vmatprep.subr.bf16.mxu0 %v2027
          %2345 = vmatpush1.bf16.msra.mxu0 %v2026
          %2346 = vmatprep.subr.bf16.mxu0 %v2031
          %2347 = vmatpush1.bf16.msra.mxu0 %v2030
          %2348 = vmatprep.subr.bf16.mxu0 %v2035
          %2349 = vmatpush1.bf16.msra.mxu0 %v2034
          %2350 = vmatprep.subr.bf16.mxu0 %v2039
          %2351 = vmatpush1.bf16.msra.mxu0 %v2038
          %2352 = vmatprep.subr.bf16.mxu0 %v2043
          %2353 = vmatpush1.bf16.msra.mxu0 %v2042
          %2354 = vmatprep.subr.bf16.mxu0 %v2047
          %2355 = vmatpush1.bf16.msra.mxu0 %v2046
          %2356 = vmatprep.subr.bf16.mxu0 %v2051
          %2357 = vmatpush1.bf16.msra.mxu0 %v2050
          %2358 = vmatprep.mubr.bf16.mxu0 %v1451
          %2359 = vmatmul.mubr.bf16.gmra.mrb[0].mxu0 %v1450
          %v2360 = vpop.f32.mrb[0].mxu0
          %v2361 = vadd.f32 %v1595, %v2360
          %v2362 = vpop.f32.mrb[0].mxu0
          %v2363 = vadd.f32 %v1599, %v2362
          %v2364 = vpop.f32.mrb[0].mxu0
          %v2365 = vpop.f32.mrb[0].mxu0
          %2366 = vdwg.mxu0
          %2367 = vmatprep.subr.bf16.mxu0 %v2055
          %2368 = vmatpush1.bf16.msra.mxu0 %v2054
          %2369 = vmatprep.subr.bf16.mxu0 %v2059
          %2370 = vmatpush1.bf16.msra.mxu0 %v2058
          %2371 = vmatprep.subr.bf16.mxu0 %v2063
          %2372 = vmatpush1.bf16.msra.mxu0 %v2062
          %2373 = vmatprep.subr.bf16.mxu0 %v2067
          %2374 = vmatpush1.bf16.msra.mxu0 %v2066
          %2375 = vmatprep.subr.bf16.mxu0 %v2071
          %2376 = vmatpush1.bf16.msra.mxu0 %v2070
          %2377 = vmatprep.subr.bf16.mxu0 %v2075
          %2378 = vmatpush1.bf16.msra.mxu0 %v2074
          %2379 = vmatprep.subr.bf16.mxu0 %v2079
          %2380 = vmatpush1.bf16.msra.mxu0 %v2078
          %2381 = vmatprep.subr.bf16.mxu0 %v2083
          %2382 = vmatpush1.bf16.msra.mxu0 %v2082
          %2383 = vmatprep.subr.bf16.mxu0 %v2087
          %2384 = vmatpush1.bf16.msra.mxu0 %v2086
          %2385 = vmatprep.subr.bf16.mxu0 %v2091
          %2386 = vmatpush1.bf16.msra.mxu0 %v2090
          %2387 = vmatprep.subr.bf16.mxu0 %v2095
          %2388 = vmatpush1.bf16.msra.mxu0 %v2094
          %2389 = vmatprep.subr.bf16.mxu0 %v2099
          %2390 = vmatpush1.bf16.msra.mxu0 %v2098
          %2391 = vmatprep.subr.bf16.mxu0 %v2103
          %2392 = vmatpush1.bf16.msra.mxu0 %v2102
          %2393 = vmatprep.subr.bf16.mxu0 %v2107
          %2394 = vmatpush1.bf16.msra.mxu0 %v2106
          %2395 = vmatprep.subr.bf16.mxu0 %v2111
          %2396 = vmatpush1.bf16.msra.mxu0 %v2110
          %2397 = vmatprep.subr.bf16.mxu0 %v2115
          %2398 = vmatpush1.bf16.msra.mxu0 %v2114
          %2399 = vmatprep.mubr.bf16.mxu0 %v1453
          %2400 = vmatmul.mubr.bf16.gmra.mrb[0].mxu0 %v1452
          %v2401 = vpop.f32.mrb[0].mxu0
          %v2402 = vadd.f32 %v2361, %v2401
          %v2403 = vpop.f32.mrb[0].mxu0
          %v2404 = vadd.f32 %v2363, %v2403
          %v2405 = vpop.f32.mrb[0].mxu0
          %v2406 = vpop.f32.mrb[0].mxu0
          %2407 = vdwg.mxu0
          %v2408 = vmax.f32 %v2320, 0.0
          %v2409 = vmax.f32 %v2322, 0.0
          %v2410 = vmax.f32 %v2402, 0.0
          %v2411 = vmax.f32 %v2404, 0.0
          %v2416 = vcombine.low %v2408, %v2409
          %v2417 = vcombine.low %v2410, %v2411
          %v2419 = vunpack.c.l.s4 1983009808
          %v2420 = vunpack.c.0.s8 %v2419
          %v2421 = vlaneseq
          %v2422 = vshrl.u32 %v2421, 7
          %v2423 = vsub.s32 %v2420, %v2422
          %v2424 = vrot.slane %v2416, %v2423
          %v2426 = vunpack.c.l.s4 1983009808
          %v2427 = vunpack.c.0.s8 %v2426
          %v2428 = vlaneseq
          %v2429 = vshrl.u32 %v2428, 7
          %v2430 = vsub.s32 %v2427, %v2429
          %v2431 = vrot.slane %v2417, %v2430
          %v2432 = vcombine.low %v2424, %v2431
          %2434 = vst [vmem:[%s367] sm:$0xff] %v2432
        $region76: #{semantic_net_forward.1} parent=59 // pred_fallthru
          _
        %p2435 = scmp.lt.s32.totalorder %s23, 1
        %s2436 = scalar_select %p2435, %s23, 1
        %s2437 = smul.addr %s2436, 4
        %s2438 = smul.addr %s2437, 2
        %s2439 = scalar_lea.vmem %s10, %s2438
        // Predicated region
        $region77: #{semantic_net_forward.1} parent=59 // pred_check
          %p2440 = pneg %p251
        $region78: #{semantic_net_forward.1} parent=59 // pred_check_branch
          %2442 = sbr.rel (%p2440) target = $region80
        $region79: #{semantic_net_forward.1} parent=59 // pred_region
          _
        $region80: #{semantic_net_forward.1} parent=59 // pred_fallthru
          _
      $region60: #{semantic_net_forward.1} parent=5 // pred_fallthru
        _
      %p2443 = scmp.le.s32.totalorder 2, %s18
      // Predicated region
      $region81: #{semantic_net_forward.1} parent=5 // pred_check
        %p2444 = pneg %p2443
      $region82: #{semantic_net_forward.1} parent=5 // pred_check_branch
        %2446 = sbr.rel (%p2444) target = $region84
      $region83: #{semantic_net_forward.1} parent=5 // pred_region
        %s2447 = ssub.s32 %s18, 2
        // Predicated region
        $region85: #{semantic_net_forward.1} parent=83 // pred_check
          %p2448 = pneg %p257
        $region86: #{semantic_net_forward.1} parent=83 // pred_check_branch
          %2450 = sbr.rel (%p2448) target = $region88
        $region87: #{semantic_net_forward.1} parent=83 // pred_region
          %p2451 = scmp.lt.s32.totalorder %s24, 1
          %s2452 = scalar_select %p2451, %s24, 1
          %s2453 = smul.addr %s2452, 4
          %s2454 = smul.addr %s2453, 2
          %s2455 = scalar_lea.vmem %s10, %s2454
        $region88: #{semantic_net_forward.1} parent=83 // pred_fallthru
          _
      $region84: #{semantic_net_forward.1} parent=5 // pred_fallthru
        _
    $region6: #{semantic_net_forward.1} parent=1 // loop_footer
      %s22 = sadd.s32 1, %s18
    $region7: #{semantic_net_forward.1} parent=1 // loop_footer_branch
      %17 = sbr.rel target = $region3
    $region8: #{semantic_net_forward.1} parent=1 // loop_exit
      _
    %2456 = vsyncpa [#allocation3], 1
    %s2457 = scalar_lea.sflag [#allocation3], 1
    %2458 = vsyncpa %s2457, 1
    %2459 = vsyncpa [#allocation5], 1

</llo_original>
